<compile_context>
chip_gen: v5e
topology: v5e:2x2
jax: 0.10.0
libtpu: 0.0.40
codegen_flags: <defaults>
</compile_context>

<pallas_src>
import functools
import math

import jax
import jax.numpy as jnp
from jax import lax
from jax.experimental import pallas as pl
from jax.experimental.pallas import tpu as pltpu


def pam_kernel(nkeys_ref, gamma_ref, q_ref, k_ref, v_ref, x_ref, out_ref,
               m_ref, l_ref, acc_ref, *, mask_keys, tk):
    ki = pl.program_id(2)

    @pl.when(ki == 0)
    def _init():
        m_ref[...] = jnp.full_like(m_ref, -jnp.inf)
        l_ref[...] = jnp.zeros_like(l_ref)
        acc_ref[...] = jnp.zeros_like(acc_ref)

    # scores s[i, j] = q_i . k_j  -> (tq, tk); bf16 MXU issue, f32 accumulate.
    s = jnp.dot(q_ref[0], k_ref[0], preferred_element_type=jnp.float32)

    if mask_keys:
        # Padded key columns (beyond the true sequence length) get a large
        # negative score -> exp underflows to exactly 0.
        col = lax.broadcasted_iota(jnp.int32, s.shape, 1) + ki * tk
        s = jnp.where(col < nkeys_ref[0], s, -1e30)

    # ---- online softmax with deferred normalization (all f32) ----
    m_prev = m_ref[...]                                         # (tq, 1)
    m_new = jnp.maximum(m_prev, jnp.max(s, axis=-1, keepdims=True))
    alpha = jnp.exp(m_prev - m_new)                             # rescale factor
    p = jnp.exp(s - m_new)                                      # (tq, tk)
    l_ref[...] = alpha * l_ref[...] + jnp.sum(p, axis=-1, keepdims=True)
    m_ref[...] = m_new

    # acc[i, :] += sum_j p[i, j] * v[j, :]   (bf16 operands, f32 accumulator)
    acc_ref[...] = alpha * acc_ref[...] + jnp.dot(
        p.astype(v_ref.dtype), v_ref[0], preferred_element_type=jnp.float32)

    @pl.when(ki == pl.num_programs(2) - 1)
    def _finalize():
        inv_l = pl.reciprocal(l_ref[...], approx=True)          # EUP slot
        o = acc_ref[...] * inv_l                                # (tq, C) f32
        out_ref[0] = gamma_ref[0] * o + x_ref[0]                # f32 residual


def _round_up(x, m):
    return ((x + m - 1) // m) * m


def _pick_tile(n, requested):
    if requested is not None:
        return requested
    if n < 128:
        return _round_up(max(n, 8), 8)        # one small (padded) tile
    if n >= 256 and _round_up(n, 256) == _round_up(n, 128):
        return 256                            # native v6e/v7x MXU width
    return 128


def pam_forward(x, params, *, tq=None, tk=None):
    B, C, H, W = x.shape
    N = H * W
    hp = lax.Precision.HIGHEST

    wq, bq = params["wq"], params["bq"]            # (Cq, C), (Cq, 1)
    wk, bk = params["wk"], params["bk"]            # (Cq, C), (Cq, 1)
    wv, bv = params["wv"], params["bv"]            # (C, C),  (C, 1)
    Cq = wq.shape[0]

    xf = x.reshape(B, C, N).astype(jnp.float32)

    # Precompute the three 1x1-conv projections once (O(N*C^2), tiny vs the
    # O(N^2*C) attention) and stream them in bf16.
    q_proj = (jnp.einsum("qc,bcn->bnq", wq, xf, precision=hp)
              + bq.reshape(1, 1, Cq)).astype(jnp.bfloat16)       # (B, N, Cq)
    k_proj = (jnp.einsum("qc,bcn->bqn", wk, xf, precision=hp)
              + bk.reshape(1, Cq, 1)).astype(jnp.bfloat16)       # (B, Cq, N)
    v_proj = (jnp.einsum("vc,bcn->bnv", wv, xf, precision=hp)
              + bv.reshape(1, 1, C)).astype(jnp.bfloat16)        # (B, N, C)
    x_res = jnp.transpose(xf, (0, 2, 1))                         # (B, N, C) f32

    tq = _pick_tile(N, tq)
    tk = _pick_tile(N, tk)
    n_pad = _round_up(N, math.lcm(tq, tk))
    if n_pad != N:
        pn = n_pad - N
        q_proj = jnp.pad(q_proj, ((0, 0), (0, pn), (0, 0)))
        k_proj = jnp.pad(k_proj, ((0, 0), (0, 0), (0, pn)))
        v_proj = jnp.pad(v_proj, ((0, 0), (0, pn), (0, 0)))
        x_res = jnp.pad(x_res, ((0, 0), (0, pn), (0, 0)))

    nkeys = jnp.array([N], jnp.int32)
    gamma = params["gamma"].astype(jnp.float32)

    grid = (B, n_pad // tq, n_pad // tk)
    kernel = functools.partial(pam_kernel, mask_keys=(n_pad != N), tk=tk)

    out_t = pl.pallas_call(
        kernel,
        out_shape=jax.ShapeDtypeStruct((B, n_pad, C), jnp.float32),
        grid=grid,
        in_specs=[
            pl.BlockSpec(memory_space=pltpu.SMEM),                     # nkeys (1,)
            pl.BlockSpec(memory_space=pltpu.SMEM),                     # gamma (1,)
            pl.BlockSpec((1, tq, Cq), lambda b, qi, ki: (b, qi, 0)),   # q tile
            pl.BlockSpec((1, Cq, tk), lambda b, qi, ki: (b, 0, ki)),   # k tile
            pl.BlockSpec((1, tk, C), lambda b, qi, ki: (b, ki, 0)),    # v tile
            pl.BlockSpec((1, tq, C), lambda b, qi, ki: (b, qi, 0)),    # residual
        ],
        out_specs=pl.BlockSpec((1, tq, C), lambda b, qi, ki: (b, qi, 0)),
        scratch_shapes=[
            pltpu.VMEM((tq, 1), jnp.float32),    # running max
            pltpu.VMEM((tq, 1), jnp.float32),    # running sum
            pltpu.VMEM((tq, C), jnp.float32),    # output accumulator
        ],
        compiler_params=pltpu.CompilerParams(
            dimension_semantics=("parallel", "parallel", "arbitrary"),
            vmem_limit_bytes=48 * 1024 * 1024),
    )(nkeys, gamma, q_proj, k_proj, v_proj, x_res)

    out_t = out_t[:, :N, :]
    return jnp.transpose(out_t, (0, 2, 1)).reshape(B, C, H, W)


def pam_reference(x, params):
    """Pure-JAX reference matching the PyTorch forward (full precision)."""
    B, C, H, W = x.shape
    N = H * W
    hp = lax.Precision.HIGHEST
    xf = x.reshape(B, C, N)
    q = jnp.einsum("qc,bcn->bqn", params["wq"], xf, precision=hp) + params["bq"][None]
    k = jnp.einsum("qc,bcn->bqn", params["wk"], xf, precision=hp) + params["bk"][None]
    v = jnp.einsum("vc,bcn->bvn", params["wv"], xf, precision=hp) + params["bv"][None]
    energy = jnp.einsum("bci,bcj->bij", q, k, precision=hp)
    attn = jax.nn.softmax(energy, axis=-1)
    o = jnp.einsum("bcj,bij->bci", v, attn, precision=hp)
    out = params["gamma"][0] * o + xf
    return out.reshape(B, C, H, W)


def init_pam_params(key, in_dim):
    """Deterministic init matching the PyTorch module's parameter shapes."""
    cq = in_dim // 8
    kq, kk, kv, kbq, kbk, kbv = jax.random.split(key, 6)
    scale = 0.1
    return {
        # Conv2d(kernel_size=1) weights (Cout, Cin, 1, 1) squeezed to (Cout, Cin)
        "wq": scale * jax.random.normal(kq, (cq, in_dim), jnp.float32),
        "bq": scale * jax.random.normal(kbq, (cq, 1), jnp.float32),
        "wk": scale * jax.random.normal(kk, (cq, in_dim), jnp.float32),
        "bk": scale * jax.random.normal(kbk, (cq, 1), jnp.float32),
        "wv": scale * jax.random.normal(kv, (in_dim, in_dim), jnp.float32),
        "bv": scale * jax.random.normal(kbv, (in_dim, 1), jnp.float32),
        # nn.Parameter(torch.zeros(1)) in the module
        "gamma": jnp.zeros((1,), jnp.float32),
    }


if __name__ == "__main__":
    # Small shapes: batch=2, channels=64 (in_dim // 8 = 8), spatial 16x16
    # -> N = 256 = one 256-wide q tile x one 256-wide k tile, no padding.
    B, C, H, W = 2, 64, 16, 16

    key = jax.random.PRNGKey(0)
    kx, kp = jax.random.split(key)
    x = jax.random.normal(kx, (B, C, H, W), jnp.float32)
    params = init_pam_params(kp, C)
    # Module init has gamma=0 (output == input); use a nonzero gamma in the test
    # so the attention path is actually exercised by the correctness check.
    params["gamma"] = jnp.array([0.5], jnp.float32)

    out = pam_forward(x, params)
    out = jax.block_until_ready(out)

    ref = pam_reference(x, params)
    assert out.shape == (B, C, H, W)
    # Streamed Q/K/V are bf16 (f32 softmax state / accumulator) -> relaxed tol.
    assert jnp.allclose(out, ref, atol=3e-2, rtol=3e-2), "mismatch vs reference"

    print("KERNEL_OK")
</pallas_src>

<mosaic_0001>
module attributes {stable_mosaic.version = 11 : i64} {
  func.func @pam_kernel(%arg0: i32, %arg1: i32, %arg2: i32, %arg3: memref<1xi32, #tpu.memory_space<smem>>, %arg4: memref<1xf32, #tpu.memory_space<smem>>, %arg5: memref<1x256x8xbf16, #tpu.memory_space<vmem>>, %arg6: memref<1x8x256xbf16, #tpu.memory_space<vmem>>, %arg7: memref<1x256x64xbf16, #tpu.memory_space<vmem>>, %arg8: memref<1x256x64xf32, #tpu.memory_space<vmem>>, %arg9: memref<1x256x64xf32, #tpu.memory_space<vmem>>, %arg10: memref<256x1xf32, #tpu.memory_space<vmem>>, %arg11: memref<256x1xf32, #tpu.memory_space<vmem>>, %arg12: memref<256x64xf32, #tpu.memory_space<vmem>>) attributes {dimension_semantics = [#tpu.dimension_semantics<parallel>, #tpu.dimension_semantics<parallel>, #tpu.dimension_semantics<arbitrary>], iteration_bounds = array<i64: 2, 1, 1>, scalar_prefetch = 0 : i64, scratch_operands = 3 : i64, tpu.core_type = #tpu.core_type<tc>, window_params = [{transform_indices = @transform_0, window_bounds = array<i64: 1>}, {transform_indices = @transform_1, window_bounds = array<i64: 1>}, {transform_indices = @transform_2, window_bounds = array<i64: 1, 256, 8>}, {transform_indices = @transform_3, window_bounds = array<i64: 1, 8, 256>}, {transform_indices = @transform_4, window_bounds = array<i64: 1, 256, 64>}, {transform_indices = @transform_5, window_bounds = array<i64: 1, 256, 64>}, {transform_indices = @transform_6, window_bounds = array<i64: 1, 256, 64>}]} {
    %c0_i32 = arith.constant 0 : i32
    %0 = arith.cmpi eq, %arg2, %c0_i32 : i32
    %1 = arith.extui %0 : i1 to i32
    %c0_i32_0 = arith.constant 0 : i32
    %2 = arith.cmpi ne, %1, %c0_i32_0 : i32
    scf.if %2 {
      %cst_26 = arith.constant 0xFF800000 : f32
      %36 = vector.broadcast %cst_26 : f32 to vector<256x1xf32>
      %c0_27 = arith.constant 0 : index
      %c0_28 = arith.constant 0 : index
      %37 = vector.load %arg10[%c0_27, %c0_28] : memref<256x1xf32, #tpu.memory_space<vmem>>, vector<256x1xf32>
      tpu.vector_store %arg10[%c0_27, %c0_28], %36 {strides = array<i32>} : memref<256x1xf32, #tpu.memory_space<vmem>>, vector<256x1xf32>,
      %cst_29 = arith.constant 0.000000e+00 : f32
      %38 = vector.broadcast %cst_29 : f32 to vector<256x1xf32>
      %c0_30 = arith.constant 0 : index
      %c0_31 = arith.constant 0 : index
      %39 = vector.load %arg11[%c0_30, %c0_31] : memref<256x1xf32, #tpu.memory_space<vmem>>, vector<256x1xf32>
      tpu.vector_store %arg11[%c0_30, %c0_31], %38 {strides = array<i32>} : memref<256x1xf32, #tpu.memory_space<vmem>>, vector<256x1xf32>,
      %cst_32 = arith.constant 0.000000e+00 : f32
      %40 = vector.broadcast %cst_32 : f32 to vector<256x64xf32>
      %c0_33 = arith.constant 0 : index
      %c0_34 = arith.constant 0 : index
      %41 = vector.load %arg12[%c0_33, %c0_34] : memref<256x64xf32, #tpu.memory_space<vmem>>, vector<256x64xf32>
      tpu.vector_store %arg12[%c0_33, %c0_34], %40 {strides = array<i32>} : memref<256x64xf32, #tpu.memory_space<vmem>>, vector<256x64xf32>,
    } else {
    }
    %c0 = arith.constant 0 : index
    %c0_1 = arith.constant 0 : index
    %c0_2 = arith.constant 0 : index
    %3 = vector.load %arg5[%c0, %c0_1, %c0_2] : memref<1x256x8xbf16, #tpu.memory_space<vmem>>, vector<1x256x8xbf16>
    %4 = vector.shape_cast %3 : vector<1x256x8xbf16> to vector<256x8xbf16>
    %c0_3 = arith.constant 0 : index
    %c0_4 = arith.constant 0 : index
    %c0_5 = arith.constant 0 : index
    %5 = vector.load %arg6[%c0_3, %c0_4, %c0_5] : memref<1x8x256xbf16, #tpu.memory_space<vmem>>, vector<1x8x256xbf16>
    %6 = vector.shape_cast %5 : vector<1x8x256xbf16> to vector<8x256xbf16>
    %cst = arith.constant dense<0.000000e+00> : vector<256x256xf32>
    %7 = tpu.matmul %4, %6, %cst {dimension_numbers = #tpu.dot_dimension_numbers<[1], [0], [0], [1], [0, 0, 1, 1], [], []>} : vector<256x8xbf16>, vector<8x256xbf16>, vector<256x256xf32> -> vector<256x256xf32>
    %c0_6 = arith.constant 0 : index
    %c0_7 = arith.constant 0 : index
    %8 = vector.load %arg10[%c0_6, %c0_7] : memref<256x1xf32, #tpu.memory_space<vmem>>, vector<256x1xf32>
    %cst_8 = arith.constant dense<0xFF800000> : vector<256xf32>
    %9 = vector.multi_reduction <maximumf>, %7, %cst_8 [1] : vector<256x256xf32> to vector<256xf32>
    %10 = vector.shape_cast %9 : vector<256xf32> to vector<256x1xf32>
    %11 = arith.maximumf %8, %10 : vector<256x1xf32>
    %12 = arith.subf %8, %11 : vector<256x1xf32>
    %13 = math.exp %12 : vector<256x1xf32>
    %14 = vector.broadcast %11 : vector<256x1xf32> to vector<256x256xf32>
    %15 = arith.subf %7, %14 : vector<256x256xf32>
    %16 = math.exp %15 : vector<256x256xf32>
    %c0_9 = arith.constant 0 : index
    %c0_10 = arith.constant 0 : index
    %17 = vector.load %arg11[%c0_9, %c0_10] : memref<256x1xf32, #tpu.memory_space<vmem>>, vector<256x1xf32>
    %18 = arith.mulf %13, %17 : vector<256x1xf32>
    %cst_11 = arith.constant dense<0.000000e+00> : vector<256xf32>
    %19 = vector.multi_reduction <add>, %16, %cst_11 [1] : vector<256x256xf32> to vector<256xf32>
    %20 = vector.shape_cast %19 : vector<256xf32> to vector<256x1xf32>
    %21 = arith.addf %18, %20 : vector<256x1xf32>
    %c0_12 = arith.constant 0 : index
    %c0_13 = arith.constant 0 : index
    %22 = vector.load %arg11[%c0_12, %c0_13] : memref<256x1xf32, #tpu.memory_space<vmem>>, vector<256x1xf32>
    tpu.vector_store %arg11[%c0_12, %c0_13], %21 {strides = array<i32>} : memref<256x1xf32, #tpu.memory_space<vmem>>, vector<256x1xf32>,
    %c0_14 = arith.constant 0 : index
    %c0_15 = arith.constant 0 : index
    %23 = vector.load %arg10[%c0_14, %c0_15] : memref<256x1xf32, #tpu.memory_space<vmem>>, vector<256x1xf32>
    tpu.vector_store %arg10[%c0_14, %c0_15], %11 {strides = array<i32>} : memref<256x1xf32, #tpu.memory_space<vmem>>, vector<256x1xf32>,
    %c0_16 = arith.constant 0 : index
    %c0_17 = arith.constant 0 : index
    %24 = vector.load %arg12[%c0_16, %c0_17] : memref<256x64xf32, #tpu.memory_space<vmem>>, vector<256x64xf32>
    %25 = vector.broadcast %13 : vector<256x1xf32> to vector<256x64xf32>
    %26 = arith.mulf %25, %24 : vector<256x64xf32>
    %27 = arith.truncf %16 : vector<256x256xf32> to vector<256x256xbf16>
    %c0_18 = arith.constant 0 : index
    %c0_19 = arith.constant 0 : index
    %c0_20 = arith.constant 0 : index
    %28 = vector.load %arg7[%c0_18, %c0_19, %c0_20] : memref<1x256x64xbf16, #tpu.memory_space<vmem>>, vector<1x256x64xbf16>
    %29 = vector.shape_cast %28 : vector<1x256x64xbf16> to vector<256x64xbf16>
    %cst_21 = arith.constant dense<0.000000e+00> : vector<256x64xf32>
    %30 = tpu.matmul %27, %29, %cst_21 {dimension_numbers = #tpu.dot_dimension_numbers<[1], [0], [0], [1], [0, 0, 1, 1], [], []>} : vector<256x256xbf16>, vector<256x64xbf16>, vector<256x64xf32> -> vector<256x64xf32>
    %31 = arith.addf %26, %30 : vector<256x64xf32>
    %c0_22 = arith.constant 0 : index
    %c0_23 = arith.constant 0 : index
    %32 = vector.load %arg12[%c0_22, %c0_23] : memref<256x64xf32, #tpu.memory_space<vmem>>, vector<256x64xf32>
    tpu.vector_store %arg12[%c0_22, %c0_23], %31 {strides = array<i32>} : memref<256x64xf32, #tpu.memory_space<vmem>>, vector<256x64xf32>,
    %c0_i32_24 = arith.constant 0 : i32
    %33 = arith.cmpi eq, %arg2, %c0_i32_24 : i32
    %34 = arith.extui %33 : i1 to i32
    %c0_i32_25 = arith.constant 0 : i32
    %35 = arith.cmpi ne, %34, %c0_i32_25 : i32
    scf.if %35 {
      %c0_26 = arith.constant 0 : index
      %c0_27 = arith.constant 0 : index
      %36 = vector.load %arg11[%c0_26, %c0_27] : memref<256x1xf32, #tpu.memory_space<vmem>>, vector<256x1xf32>
      %37 = tpu.reciprocal %36 {approx = true} : vector<256x1xf32> -> vector<256x1xf32>
      %c0_28 = arith.constant 0 : index
      %c0_29 = arith.constant 0 : index
      %38 = vector.load %arg12[%c0_28, %c0_29] : memref<256x64xf32, #tpu.memory_space<vmem>>, vector<256x64xf32>
      %39 = vector.broadcast %37 : vector<256x1xf32> to vector<256x64xf32>
      %40 = arith.mulf %38, %39 : vector<256x64xf32>
      %c0_30 = arith.constant 0 : index
      %41 = memref.load %arg4[%c0_30] : memref<1xf32, #tpu.memory_space<smem>>
      %42 = vector.broadcast %41 : f32 to vector<256x64xf32>
      %43 = arith.mulf %42, %40 : vector<256x64xf32>
      %c0_31 = arith.constant 0 : index
      %c0_32 = arith.constant 0 : index
      %c0_33 = arith.constant 0 : index
      %44 = vector.load %arg8[%c0_31, %c0_32, %c0_33] : memref<1x256x64xf32, #tpu.memory_space<vmem>>, vector<1x256x64xf32>
      %45 = vector.shape_cast %44 : vector<1x256x64xf32> to vector<256x64xf32>
      %46 = arith.addf %43, %45 : vector<256x64xf32>
      %c0_34 = arith.constant 0 : index
      %c0_35 = arith.constant 0 : index
      %c0_36 = arith.constant 0 : index
      %47 = vector.load %arg9[%c0_34, %c0_35, %c0_36] : memref<1x256x64xf32, #tpu.memory_space<vmem>>, vector<1x256x64xf32>
      %48 = vector.shape_cast %47 : vector<1x256x64xf32> to vector<256x64xf32>
      %49 = vector.shape_cast %46 : vector<256x64xf32> to vector<1x256x64xf32>
      tpu.vector_store %arg9[%c0_34, %c0_35, %c0_36], %49 {strides = array<i32>} : memref<1x256x64xf32, #tpu.memory_space<vmem>>, vector<1x256x64xf32>,
    } else {
    }
    return
  }
  func.func @transform_0(%arg0: i32, %arg1: i32, %arg2: i32) -> i32 {
    %c0_i32 = arith.constant 0 : i32
    %c0_i32_0 = arith.constant 0 : i32
    return %c0_i32 : i32
  }
  func.func @transform_1(%arg0: i32, %arg1: i32, %arg2: i32) -> i32 {
    %c0_i32 = arith.constant 0 : i32
    %c0_i32_0 = arith.constant 0 : i32
    return %c0_i32 : i32
  }
  func.func @transform_2(%arg0: i32, %arg1: i32, %arg2: i32) -> (i32, i32, i32) {
    %c0_i32 = arith.constant 0 : i32
    %c0_i32_0 = arith.constant 0 : i32
    return %arg0, %arg1, %c0_i32 : i32, i32, i32
  }
  func.func @transform_3(%arg0: i32, %arg1: i32, %arg2: i32) -> (i32, i32, i32) {
    %c0_i32 = arith.constant 0 : i32
    %c0_i32_0 = arith.constant 0 : i32
    return %arg0, %c0_i32, %arg2 : i32, i32, i32
  }
  func.func @transform_4(%arg0: i32, %arg1: i32, %arg2: i32) -> (i32, i32, i32) {
    %c0_i32 = arith.constant 0 : i32
    %c0_i32_0 = arith.constant 0 : i32
    return %arg0, %arg2, %c0_i32 : i32, i32, i32
  }
  func.func @transform_5(%arg0: i32, %arg1: i32, %arg2: i32) -> (i32, i32, i32) {
    %c0_i32 = arith.constant 0 : i32
    %c0_i32_0 = arith.constant 0 : i32
    return %arg0, %arg1, %c0_i32 : i32, i32, i32
  }
  func.func @transform_6(%arg0: i32, %arg1: i32, %arg2: i32) -> (i32, i32, i32) {
    %c0_i32 = arith.constant 0 : i32
    %c0_i32_0 = arith.constant 0 : i32
    return %arg0, %arg1, %c0_i32 : i32, i32, i32
  }
}

</mosaic_0001>

<llo_original>
// kernel: tpu_custom_call.1
$region0: #{tpu_custom_call.1}
  #allocation0 [shape = 'u32[]', space=smem, size = 0x4, offset = 0x4, fixed_abs, tag = 'smem constant byte address 0x4 - core index']
  #allocation1 [shape = 'u32[72,128]{1,0:T(1,128)}', space=vmem, size = 0x9000, scoped, tag = 'internal scratch']
  #allocation2 [shape = 'f32[256,1]{1,0:T(8,128)}', space=vmem, size = 0x20000, scoped, tag = 'scratch operand']
  #allocation3 [shape = 'f32[256,1]{1,0:T(8,128)}', space=vmem, size = 0x20000, scoped, tag = 'scratch operand']
  #allocation4 [shape = 'f32[256,64]{1,0:T(8,128)}', space=vmem, size = 0x20000, scoped, tag = 'scratch operand']
  #allocation5 [shape = 's32[1]{0:T(128)S(6)}', space=smem, size = 0x200, scoped, tag = 'scoped memory for tpu_custom_call.1']
  #allocation6 [shape = 'f32[1]{0:T(128)S(6)}', space=smem, size = 0x200, scoped, tag = 'scoped memory for tpu_custom_call.1']
  %s0 = inlined_call_operand.<no memory space> [shape: s32[1], index: 0, kind: input, shape index: {}]
  %s1 = inlined_call_operand.<no memory space> [shape: f32[1], index: 1, kind: input, shape index: {}]
  %s2 = inlined_call_operand.vmem [shape: bf16[2,256,8], index: 2, kind: input, shape index: {}]
  %s3 = inlined_call_operand.vmem [shape: bf16[2,8,256], index: 3, kind: input, shape index: {}]
  %s4 = inlined_call_operand.vmem [shape: bf16[2,256,64], index: 4, kind: input, shape index: {}]
  %s5 = inlined_call_operand.vmem [shape: f32[2,256,64], index: 5, kind: input, shape index: {}]
  %s6 = inlined_call_operand.vmem [shape: f32[2,256,64], index: 6, kind: output, shape index: {}]
  %s7 = sld [smem:[#allocation0]]
  $region65: #{tpu_custom_call.1} parent=0
    _
  %s9 = ssub.s32 1, %s7
  %s10 = scalar_select 0, %s9, %s7
  %11 = sst [smem:[#allocation5]] %s0
  %12 = sst [smem:[#allocation6]] %s1
  loop: start=0, step=1, limit=4
  $region2: #{tpu_custom_call.1} parent=0 // loop_pre_header
    _
  $region3: #{tpu_custom_call.1} parent=0 // loop_header
    %s14 = sphi 0, %s18
    %p15 = scmp.ge.s32.totalorder %s14, 4
    %s21 = sphi 0, %s40
    %s22 = sphi 0, %s36
    %s23 = sphi 0, %s32
    %s24 = sphi 0, %s21
    %s25 = sphi 0, %s22
    %s26 = sphi 0, %s23
    %s27 = sphi 0, %s24
    %s28 = sphi 0, %s25
    %s29 = sphi 0, %s26
    %s41 = sphi 0, %s41
    %s43 = sphi 0, %s41
    %s44 = sphi 0, %s43
    %s58 = sphi 0, %s44
    %s62 = sphi 0, %s62
    %s64 = sphi 0, %s62
    %s65 = sphi 0, %s64
    %s79 = sphi 0, %s65
    %s87 = sphi 0, %s89
    %s90 = sphi 0, %s87
    %s91 = sphi 0, %s90
    %s107 = sphi 0, %s91
    %s115 = sphi 0, %s117
    %s118 = sphi 0, %s115
    %s119 = sphi 0, %s118
    %s135 = sphi 0, %s119
    %s143 = sphi 0, %s145
    %s146 = sphi 0, %s143
    %s147 = sphi 0, %s146
    %s163 = sphi 0, %s147
    %s171 = sphi 0, %s173
    %s174 = sphi 0, %s171
    %s175 = sphi 0, %s174
    %s191 = sphi 0, %s175
    %s199 = sphi 0, %s201
    %s202 = sphi 0, %s199
    %s203 = sphi 0, %s202
    %s219 = sphi 0, %s203
  $region4: #{tpu_custom_call.1} parent=0 // loop_header_branch
    %17 = sbr.rel (%p15) target = $region8
  $region5: #{tpu_custom_call.1} parent=0 // loop_body
    %s19 = ssub.s32 %s14, 1
    %s20 = ssub.s32 %s14, 2
    %s30 = sadd.s32 1, %s23
    %p31 = scmp.ge.s32.totalorder %s30, 1
    %s32 = scalar_select %p31, 0, %s30
    %s33 = sadd.s32 1, %s22
    %s34 = scalar_select %p31, %s33, %s22
    %p35 = scmp.ge.s32.totalorder %s34, 1
    %s36 = scalar_select %p35, 0, %s34
    %s37 = sadd.s32 1, %s21
    %s38 = scalar_select %p35, %s37, %s21
    %p39 = scmp.ge.s32.totalorder %s38, 2
    %s40 = scalar_select %p39, 0, %s38
    %s42 = sadd.s32 %s41, 1
    %p45 = scmp.eq.s32.totalorder %s14, 1
    %p46 = scmp.ne.s32.totalorder %s41, %s43
    %p47 = scmp.eq.s32.totalorder %s14, 0
    %p48 = por %p46, %p47
    %p49 = scmp.ne.s32.totalorder %s41, %s43
    %p50 = scmp.eq.s32.totalorder %s19, 1
    %p51 = por %p49, %p50
    %p52 = scmp.ne.s32.totalorder %s43, %s44
    %p53 = scmp.eq.s32.totalorder %s19, 0
    %p54 = por %p52, %p53
    %p55 = scmp.ne.s32.totalorder %s43, %s44
    %p56 = scmp.eq.s32.totalorder %s20, 1
    %p57 = por %p55, %p56
    %p59 = scmp.ne.s32.totalorder %s44, %s58
    %p60 = scmp.eq.s32.totalorder %s20, 0
    %p61 = por %p59, %p60
    %s63 = sadd.s32 %s62, 1
    %p66 = scmp.eq.s32.totalorder %s14, 1
    %p67 = scmp.ne.s32.totalorder %s62, %s64
    %p68 = scmp.eq.s32.totalorder %s14, 0
    %p69 = por %p67, %p68
    %p70 = scmp.ne.s32.totalorder %s62, %s64
    %p71 = scmp.eq.s32.totalorder %s19, 1
    %p72 = por %p70, %p71
    %p73 = scmp.ne.s32.totalorder %s64, %s65
    %p74 = scmp.eq.s32.totalorder %s19, 0
    %p75 = por %p73, %p74
    %p76 = scmp.ne.s32.totalorder %s64, %s65
    %p77 = scmp.eq.s32.totalorder %s20, 1
    %p78 = por %p76, %p77
    %p80 = scmp.ne.s32.totalorder %s65, %s79
    %p81 = scmp.eq.s32.totalorder %s20, 0
    %p82 = por %p80, %p81
    %s83 = ssub.s32 %s21, %s40
    %s84 = ssub.s32 %s22, %s36
    %s85 = sor.u32 %s83, %s84
    %p86 = scmp.eq.s32.totalorder %s85, 0
    %s88 = sadd.s32 %s87, 1
    %s89 = scalar_select %p86, %s87, %s88
    %p92 = pneg %p86
    %p93 = scmp.eq.s32.totalorder %s14, 1
    %p94 = por %p92, %p93
    %p95 = scmp.ne.s32.totalorder %s87, %s90
    %p96 = scmp.eq.s32.totalorder %s14, 0
    %p97 = por %p95, %p96
    %p98 = scmp.ne.s32.totalorder %s87, %s90
    %p99 = scmp.eq.s32.totalorder %s19, 1
    %p100 = por %p98, %p99
    %p101 = scmp.ne.s32.totalorder %s90, %s91
    %p102 = scmp.eq.s32.totalorder %s19, 0
    %p103 = por %p101, %p102
    %p104 = scmp.ne.s32.totalorder %s90, %s91
    %p105 = scmp.eq.s32.totalorder %s20, 1
    %p106 = por %p104, %p105
    %p108 = scmp.ne.s32.totalorder %s91, %s107
    %p109 = scmp.eq.s32.totalorder %s20, 0
    %p110 = por %p108, %p109
    %s111 = ssub.s32 %s21, %s40
    %s112 = ssub.s32 %s23, %s32
    %s113 = sor.u32 %s111, %s112
    %p114 = scmp.eq.s32.totalorder %s113, 0
    %s116 = sadd.s32 %s115, 1
    %s117 = scalar_select %p114, %s115, %s116
    %p120 = pneg %p114
    %p121 = scmp.eq.s32.totalorder %s14, 1
    %p122 = por %p120, %p121
    %p123 = scmp.ne.s32.totalorder %s115, %s118
    %p124 = scmp.eq.s32.totalorder %s14, 0
    %p125 = por %p123, %p124
    %p126 = scmp.ne.s32.totalorder %s115, %s118
    %p127 = scmp.eq.s32.totalorder %s19, 1
    %p128 = por %p126, %p127
    %p129 = scmp.ne.s32.totalorder %s118, %s119
    %p130 = scmp.eq.s32.totalorder %s19, 0
    %p131 = por %p129, %p130
    %p132 = scmp.ne.s32.totalorder %s118, %s119
    %p133 = scmp.eq.s32.totalorder %s20, 1
    %p134 = por %p132, %p133
    %p136 = scmp.ne.s32.totalorder %s119, %s135
    %p137 = scmp.eq.s32.totalorder %s20, 0
    %p138 = por %p136, %p137
    %s139 = ssub.s32 %s21, %s40
    %s140 = ssub.s32 %s23, %s32
    %s141 = sor.u32 %s139, %s140
    %p142 = scmp.eq.s32.totalorder %s141, 0
    %s144 = sadd.s32 %s143, 1
    %s145 = scalar_select %p142, %s143, %s144
    %p148 = pneg %p142
    %p149 = scmp.eq.s32.totalorder %s14, 1
    %p150 = por %p148, %p149
    %p151 = scmp.ne.s32.totalorder %s143, %s146
    %p152 = scmp.eq.s32.totalorder %s14, 0
    %p153 = por %p151, %p152
    %p154 = scmp.ne.s32.totalorder %s143, %s146
    %p155 = scmp.eq.s32.totalorder %s19, 1
    %p156 = por %p154, %p155
    %p157 = scmp.ne.s32.totalorder %s146, %s147
    %p158 = scmp.eq.s32.totalorder %s19, 0
    %p159 = por %p157, %p158
    %p160 = scmp.ne.s32.totalorder %s146, %s147
    %p161 = scmp.eq.s32.totalorder %s20, 1
    %p162 = por %p160, %p161
    %p164 = scmp.ne.s32.totalorder %s147, %s163
    %p165 = scmp.eq.s32.totalorder %s20, 0
    %p166 = por %p164, %p165
    %s167 = ssub.s32 %s21, %s40
    %s168 = ssub.s32 %s22, %s36
    %s169 = sor.u32 %s167, %s168
    %p170 = scmp.eq.s32.totalorder %s169, 0
    %s172 = sadd.s32 %s171, 1
    %s173 = scalar_select %p170, %s171, %s172
    %p176 = pneg %p170
    %p177 = scmp.eq.s32.totalorder %s14, 1
    %p178 = por %p176, %p177
    %p179 = scmp.ne.s32.totalorder %s171, %s174
    %p180 = scmp.eq.s32.totalorder %s14, 0
    %p181 = por %p179, %p180
    %p182 = scmp.ne.s32.totalorder %s171, %s174
    %p183 = scmp.eq.s32.totalorder %s19, 1
    %p184 = por %p182, %p183
    %p185 = scmp.ne.s32.totalorder %s174, %s175
    %p186 = scmp.eq.s32.totalorder %s19, 0
    %p187 = por %p185, %p186
    %p188 = scmp.ne.s32.totalorder %s174, %s175
    %p189 = scmp.eq.s32.totalorder %s20, 1
    %p190 = por %p188, %p189
    %p192 = scmp.ne.s32.totalorder %s175, %s191
    %p193 = scmp.eq.s32.totalorder %s20, 0
    %p194 = por %p192, %p193
    %s195 = ssub.s32 %s21, %s40
    %s196 = ssub.s32 %s22, %s36
    %s197 = sor.u32 %s195, %s196
    %p198 = scmp.eq.s32.totalorder %s197, 0
    %s200 = sadd.s32 %s199, 1
    %s201 = scalar_select %p198, %s199, %s200
    %p204 = pneg %p198
    %p205 = scmp.eq.s32.totalorder %s14, 1
    %p206 = por %p204, %p205
    %p207 = scmp.ne.s32.totalorder %s199, %s202
    %p208 = scmp.eq.s32.totalorder %s14, 0
    %p209 = por %p207, %p208
    %p210 = scmp.ne.s32.totalorder %s199, %s202
    %p211 = scmp.eq.s32.totalorder %s19, 1
    %p212 = por %p210, %p211
    %p213 = scmp.ne.s32.totalorder %s202, %s203
    %p214 = scmp.eq.s32.totalorder %s19, 0
    %p215 = por %p213, %p214
    %p216 = scmp.ne.s32.totalorder %s202, %s203
    %p217 = scmp.eq.s32.totalorder %s20, 1
    %p218 = por %p216, %p217
    %p220 = scmp.ne.s32.totalorder %s203, %s219
    %p221 = scmp.eq.s32.totalorder %s20, 0
    %p222 = por %p220, %p221
    %p223 = scmp.le.s32.totalorder 1, %s14
    %p224 = scmp.lt.s32.totalorder %s14, 3
    %p225 = pnand %p223, %p224
    %p226 = pneg %p225
    // Predicated region
    $region9: #{tpu_custom_call.1} parent=5 // pred_check
      _
    $region10: #{tpu_custom_call.1} parent=5 // pred_check_branch
      %228 = sbr.rel (%p225) target = $region12
    $region11: #{tpu_custom_call.1} parent=5 // pred_region
      %s229 = ssub.s32 %s14, 1
      // Predicated region
      $region13: #{tpu_custom_call.1} parent=11 // pred_check
        %p230 = pneg %p54
      $region14: #{tpu_custom_call.1} parent=11 // pred_check_branch
        %232 = sbr.rel (%p230) target = $region16
      $region15: #{tpu_custom_call.1} parent=11 // pred_region
        _
      $region16: #{tpu_custom_call.1} parent=11 // pred_fallthru
        _
      // Predicated region
      $region17: #{tpu_custom_call.1} parent=11 // pred_check
        %p233 = pneg %p75
      $region18: #{tpu_custom_call.1} parent=11 // pred_check_branch
        %235 = sbr.rel (%p233) target = $region20
      $region19: #{tpu_custom_call.1} parent=11 // pred_region
        _
      $region20: #{tpu_custom_call.1} parent=11 // pred_fallthru
        _
    $region12: #{tpu_custom_call.1} parent=5 // pred_fallthru
      _
    %p236 = scmp.lt.s32.totalorder %s14, 2
    // Predicated region
    $region21: #{tpu_custom_call.1} parent=5 // pred_check
      %p237 = pneg %p236
    $region22: #{tpu_custom_call.1} parent=5 // pred_check_branch
      %239 = sbr.rel (%p237) target = $region24
    $region23: #{tpu_custom_call.1} parent=5 // pred_region
      // Predicated region
      $region25: #{tpu_custom_call.1} parent=23 // pred_check
        %p240 = pneg %p97
      $region26: #{tpu_custom_call.1} parent=23 // pred_check_branch
        %242 = sbr.rel (%p240) target = $region28
      $region27: #{tpu_custom_call.1} parent=23 // pred_region
        %s243 = smul.u32 32, %s22
        %p244 = scmp.lt.s32.totalorder %s21, 1
        %s245 = scalar_select %p244, %s21, 1
        %p246 = scmp.lt.s32.totalorder %s243, 31
        %s247 = scalar_select %p246, %s243, 31
        %s248 = smul.addr %s245, 32
        %s249 = sadd.s32 %s247, %s248
        %s250 = smul.addr %s249, 4
        %s251 = scalar_lea.vmem %s2, %s250
        %s252 = smul.u32 32, %s22
      $region28: #{tpu_custom_call.1} parent=23 // pred_fallthru
        _
      // Predicated region
      $region29: #{tpu_custom_call.1} parent=23 // pred_check
        %p253 = pneg %p125
      $region30: #{tpu_custom_call.1} parent=23 // pred_check_branch
        %255 = sbr.rel (%p253) target = $region32
      $region31: #{tpu_custom_call.1} parent=23 // pred_region
        %s256 = smul.u32 2, %s23
        %p257 = scmp.lt.s32.totalorder %s21, 1
        %s258 = scalar_select %p257, %s21, 1
        %p259 = scmp.lt.s32.totalorder %s256, 1
        %s260 = scalar_select %p259, %s256, 1
        %s261 = smul.addr %s258, 2
        %s262 = sadd.s32 %s260, %s261
        %s263 = smul.addr %s262, 4
        %s264 = scalar_lea.vmem %s3, %s263
        %s265 = smul.u32 2, %s23
      $region32: #{tpu_custom_call.1} parent=23 // pred_fallthru
        _
      // Predicated region
      $region33: #{tpu_custom_call.1} parent=23 // pred_check
        %p266 = pneg %p153
      $region34: #{tpu_custom_call.1} parent=23 // pred_check_branch
        %268 = sbr.rel (%p266) target = $region36
      $region35: #{tpu_custom_call.1} parent=23 // pred_region
        %s269 = smul.u32 32, %s23
        %p270 = scmp.lt.s32.totalorder %s21, 1
        %s271 = scalar_select %p270, %s21, 1
        %p272 = scmp.lt.s32.totalorder %s269, 31
        %s273 = scalar_select %p272, %s269, 31
        %s274 = smul.addr %s271, 32
        %s275 = sadd.s32 %s273, %s274
        %s276 = smul.addr %s275, 4
        %s277 = scalar_lea.vmem %s4, %s276
        %s278 = smul.u32 32, %s23
      $region36: #{tpu_custom_call.1} parent=23 // pred_fallthru
        _
      // Predicated region
      $region37: #{tpu_custom_call.1} parent=23 // pred_check
        %p279 = pneg %p181
      $region38: #{tpu_custom_call.1} parent=23 // pred_check_branch
        %281 = sbr.rel (%p279) target = $region40
      $region39: #{tpu_custom_call.1} parent=23 // pred_region
        %s282 = smul.u32 32, %s22
        %p283 = scmp.lt.s32.totalorder %s21, 1
        %s284 = scalar_select %p283, %s21, 1
        %p285 = scmp.lt.s32.totalorder %s282, 31
        %s286 = scalar_select %p285, %s282, 31
        %s287 = smul.addr %s284, 32
        %s288 = sadd.s32 %s286, %s287
        %s289 = smul.addr %s288, 8
        %s290 = scalar_lea.vmem %s5, %s289
        %s291 = smul.u32 32, %s22
      $region40: #{tpu_custom_call.1} parent=23 // pred_fallthru
        _
    $region24: #{tpu_custom_call.1} parent=5 // pred_fallthru
      _
    %p292 = scmp.le.s32.totalorder 1, %s14
    %p293 = scmp.lt.s32.totalorder %s14, 3
    %p294 = pnand %p292, %p293
    %p295 = pneg %p294
    // Predicated region
    $region41: #{tpu_custom_call.1} parent=5 // pred_check
      _
    $region42: #{tpu_custom_call.1} parent=5 // pred_check_branch
      %297 = sbr.rel (%p294) target = $region44
    $region43: #{tpu_custom_call.1} parent=5 // pred_region
      %s298 = ssub.s32 %s14, 1
      %p299 = pneg %p54
      %p300 = pneg %p51
      %p301 = pneg %p75
      %p302 = pneg %p72
      %s303 = smul.u32 32, %s25
      %p304 = scmp.lt.s32.totalorder %s24, 1
      %s305 = scalar_select %p304, %s24, 1
      %p306 = scmp.lt.s32.totalorder %s303, 31
      %s307 = scalar_select %p306, %s303, 31
      %s308 = smul.addr %s305, 32
      %s309 = sadd.s32 %s307, %s308
      %s310 = smul.addr %s309, 4
      %s311 = scalar_lea.vmem %s2, %s310
      %p312 = pneg %p103
      %p313 = pneg %p100
      %s314 = smul.u32 2, %s26
      %p315 = scmp.lt.s32.totalorder %s24, 1
      %s316 = scalar_select %p315, %s24, 1
      %p317 = scmp.lt.s32.totalorder %s314, 1
      %s318 = scalar_select %p317, %s314, 1
      %s319 = smul.addr %s316, 2
      %s320 = sadd.s32 %s318, %s319
      %s321 = smul.addr %s320, 4
      %s322 = scalar_lea.vmem %s3, %s321
      %p323 = pneg %p131
      %p324 = pneg %p128
      %s325 = smul.u32 32, %s26
      %p326 = scmp.lt.s32.totalorder %s24, 1
      %s327 = scalar_select %p326, %s24, 1
      %p328 = scmp.lt.s32.totalorder %s325, 31
      %s329 = scalar_select %p328, %s325, 31
      %s330 = smul.addr %s327, 32
      %s331 = sadd.s32 %s329, %s330
      %s332 = smul.addr %s331, 4
      %s333 = scalar_lea.vmem %s4, %s332
      %p334 = pneg %p159
      %p335 = pneg %p156
      %s336 = smul.u32 32, %s25
      %p337 = scmp.lt.s32.totalorder %s24, 1
      %s338 = scalar_select %p337, %s24, 1
      %p339 = scmp.lt.s32.totalorder %s336, 31
      %s340 = scalar_select %p339, %s336, 31
      %s341 = smul.addr %s338, 32
      %s342 = sadd.s32 %s340, %s341
      %s343 = smul.addr %s342, 8
      %s344 = scalar_lea.vmem %s5, %s343
      %p345 = pneg %p187
      %p346 = pneg %p184
      %p347 = pneg %p215
      %p348 = pneg %p212
      %s349 = smul.u32 32, %s25
      %p350 = scmp.lt.s32.totalorder %s24, 1
      %s351 = scalar_select %p350, %s24, 1
      %p352 = scmp.lt.s32.totalorder %s349, 31
      %s353 = scalar_select %p352, %s349, 31
      %s354 = smul.addr %s351, 32
      %s355 = sadd.s32 %s353, %s354
      %s356 = smul.addr %s355, 8
      %s357 = scalar_lea.vmem %s6, %s356
      %s358 = smul.u32 32, %s25
      %p359 = scmp.lt.s32.totalorder %s24, 1
      %s360 = scalar_select %p359, %s24, 1
      %p361 = scmp.lt.s32.totalorder %s358, 31
      %s362 = scalar_select %p361, %s358, 31
      %s363 = smul.addr %s360, 32
      %s364 = sadd.s32 %s362, %s363
      %s365 = smul.addr %s364, 4
      %s366 = scalar_lea.vmem %s2, %s365
      %s367 = smul.u32 32, %s25
      %s368 = smul.u32 2, %s26
      %p369 = scmp.lt.s32.totalorder %s24, 1
      %s370 = scalar_select %p369, %s24, 1
      %p371 = scmp.lt.s32.totalorder %s368, 1
      %s372 = scalar_select %p371, %s368, 1
      %s373 = smul.addr %s370, 2
      %s374 = sadd.s32 %s372, %s373
      %s375 = smul.addr %s374, 4
      %s376 = scalar_lea.vmem %s3, %s375
      %s377 = smul.u32 2, %s26
      %s378 = smul.u32 32, %s26
      %p379 = scmp.lt.s32.totalorder %s24, 1
      %s380 = scalar_select %p379, %s24, 1
      %p381 = scmp.lt.s32.totalorder %s378, 31
      %s382 = scalar_select %p381, %s378, 31
      %s383 = smul.addr %s380, 32
      %s384 = sadd.s32 %s382, %s383
      %s385 = smul.addr %s384, 4
      %s386 = scalar_lea.vmem %s4, %s385
      %s387 = smul.u32 32, %s26
      %s388 = smul.u32 32, %s25
      %p389 = scmp.lt.s32.totalorder %s24, 1
      %s390 = scalar_select %p389, %s24, 1
      %p391 = scmp.lt.s32.totalorder %s388, 31
      %s392 = scalar_select %p391, %s388, 31
      %s393 = smul.addr %s390, 32
      %s394 = sadd.s32 %s392, %s393
      %s395 = smul.addr %s394, 8
      %s396 = scalar_lea.vmem %s5, %s395
      %s397 = smul.u32 32, %s25
      %s398 = smul.u32 32, %s25
      %p399 = scmp.lt.s32.totalorder %s24, 1
      %s400 = scalar_select %p399, %s24, 1
      %p401 = scmp.lt.s32.totalorder %s398, 31
      %s402 = scalar_select %p401, %s398, 31
      %s403 = smul.addr %s400, 32
      %s404 = sadd.s32 %s402, %s403
      %s405 = smul.addr %s404, 8
      %s406 = scalar_lea.vmem %s6, %s405
      %s407 = smul.u32 32, %s25
      %p409 = scmp.eq.s32.totalorder %s26, 0
      // Predicated region
      $region45: #{tpu_custom_call.1} parent=43 // pred_check
        %p410 = pneg %p409
      $region46: #{tpu_custom_call.1} parent=43 // pred_check_branch
        %412 = sbr.rel (%p410) target = $region48
      $region47: #{tpu_custom_call.1} parent=43 // pred_region
        %vm413 = vcmask 7168
        %414 = vst.msk [vmem:[#allocation2] sm:$0xff] %vm413, -inf
        %415 = vst.msk [vmem:[#allocation2 + $0x8] sm:$0xff] %vm413, -inf
        %416 = vst.msk [vmem:[#allocation2 + $0x10] sm:$0xff] %vm413, -inf
        %417 = vst.msk [vmem:[#allocation2 + $0x18] sm:$0xff] %vm413, -inf
        %418 = vst.msk [vmem:[#allocation2 + $0x20] sm:$0xff] %vm413, -inf
        %419 = vst.msk [vmem:[#allocation2 + $0x28] sm:$0xff] %vm413, -inf
        %420 = vst.msk [vmem:[#allocation2 + $0x30] sm:$0xff] %vm413, -inf
        %421 = vst.msk [vmem:[#allocation2 + $0x38] sm:$0xff] %vm413, -inf
        %422 = vst.msk [vmem:[#allocation2 + $0x40] sm:$0xff] %vm413, -inf
        %423 = vst.msk [vmem:[#allocation2 + $0x48] sm:$0xff] %vm413, -inf
        %424 = vst.msk [vmem:[#allocation2 + $0x50] sm:$0xff] %vm413, -inf
        %425 = vst.msk [vmem:[#allocation2 + $0x58] sm:$0xff] %vm413, -inf
        %426 = vst.msk [vmem:[#allocation2 + $0x60] sm:$0xff] %vm413, -inf
        %427 = vst.msk [vmem:[#allocation2 + $0x68] sm:$0xff] %vm413, -inf
        %428 = vst.msk [vmem:[#allocation2 + $0x70] sm:$0xff] %vm413, -inf
        %429 = vst.msk [vmem:[#allocation2 + $0x78] sm:$0xff] %vm413, -inf
        %430 = vst.msk [vmem:[#allocation2 + $0x80] sm:$0xff] %vm413, -inf
        %431 = vst.msk [vmem:[#allocation2 + $0x88] sm:$0xff] %vm413, -inf
        %432 = vst.msk [vmem:[#allocation2 + $0x90] sm:$0xff] %vm413, -inf
        %433 = vst.msk [vmem:[#allocation2 + $0x98] sm:$0xff] %vm413, -inf
        %434 = vst.msk [vmem:[#allocation2 + $0xa0] sm:$0xff] %vm413, -inf
        %435 = vst.msk [vmem:[#allocation2 + $0xa8] sm:$0xff] %vm413, -inf
        %436 = vst.msk [vmem:[#allocation2 + $0xb0] sm:$0xff] %vm413, -inf
        %437 = vst.msk [vmem:[#allocation2 + $0xb8] sm:$0xff] %vm413, -inf
        %438 = vst.msk [vmem:[#allocation2 + $0xc0] sm:$0xff] %vm413, -inf
        %439 = vst.msk [vmem:[#allocation2 + $0xc8] sm:$0xff] %vm413, -inf
        %440 = vst.msk [vmem:[#allocation2 + $0xd0] sm:$0xff] %vm413, -inf
        %441 = vst.msk [vmem:[#allocation2 + $0xd8] sm:$0xff] %vm413, -inf
        %442 = vst.msk [vmem:[#allocation2 + $0xe0] sm:$0xff] %vm413, -inf
        %443 = vst.msk [vmem:[#allocation2 + $0xe8] sm:$0xff] %vm413, -inf
        %444 = vst.msk [vmem:[#allocation2 + $0xf0] sm:$0xff] %vm413, -inf
        %445 = vst.msk [vmem:[#allocation2 + $0xf8] sm:$0xff] %vm413, -inf
        %446 = vst.msk [vmem:[#allocation3] sm:$0xff] %vm413, 0.0
        %447 = vst.msk [vmem:[#allocation3 + $0x8] sm:$0xff] %vm413, 0.0
        %448 = vst.msk [vmem:[#allocation3 + $0x10] sm:$0xff] %vm413, 0.0
        %449 = vst.msk [vmem:[#allocation3 + $0x18] sm:$0xff] %vm413, 0.0
        %450 = vst.msk [vmem:[#allocation3 + $0x20] sm:$0xff] %vm413, 0.0
        %451 = vst.msk [vmem:[#allocation3 + $0x28] sm:$0xff] %vm413, 0.0
        %452 = vst.msk [vmem:[#allocation3 + $0x30] sm:$0xff] %vm413, 0.0
        %453 = vst.msk [vmem:[#allocation3 + $0x38] sm:$0xff] %vm413, 0.0
        %454 = vst.msk [vmem:[#allocation3 + $0x40] sm:$0xff] %vm413, 0.0
        %455 = vst.msk [vmem:[#allocation3 + $0x48] sm:$0xff] %vm413, 0.0
        %456 = vst.msk [vmem:[#allocation3 + $0x50] sm:$0xff] %vm413, 0.0
        %457 = vst.msk [vmem:[#allocation3 + $0x58] sm:$0xff] %vm413, 0.0
        %458 = vst.msk [vmem:[#allocation3 + $0x60] sm:$0xff] %vm413, 0.0
        %459 = vst.msk [vmem:[#allocation3 + $0x68] sm:$0xff] %vm413, 0.0
        %460 = vst.msk [vmem:[#allocation3 + $0x70] sm:$0xff] %vm413, 0.0
        %461 = vst.msk [vmem:[#allocation3 + $0x78] sm:$0xff] %vm413, 0.0
        %462 = vst.msk [vmem:[#allocation3 + $0x80] sm:$0xff] %vm413, 0.0
        %463 = vst.msk [vmem:[#allocation3 + $0x88] sm:$0xff] %vm413, 0.0
        %464 = vst.msk [vmem:[#allocation3 + $0x90] sm:$0xff] %vm413, 0.0
        %465 = vst.msk [vmem:[#allocation3 + $0x98] sm:$0xff] %vm413, 0.0
        %466 = vst.msk [vmem:[#allocation3 + $0xa0] sm:$0xff] %vm413, 0.0
        %467 = vst.msk [vmem:[#allocation3 + $0xa8] sm:$0xff] %vm413, 0.0
        %468 = vst.msk [vmem:[#allocation3 + $0xb0] sm:$0xff] %vm413, 0.0
        %469 = vst.msk [vmem:[#allocation3 + $0xb8] sm:$0xff] %vm413, 0.0
        %470 = vst.msk [vmem:[#allocation3 + $0xc0] sm:$0xff] %vm413, 0.0
        %471 = vst.msk [vmem:[#allocation3 + $0xc8] sm:$0xff] %vm413, 0.0
        %472 = vst.msk [vmem:[#allocation3 + $0xd0] sm:$0xff] %vm413, 0.0
        %473 = vst.msk [vmem:[#allocation3 + $0xd8] sm:$0xff] %vm413, 0.0
        %474 = vst.msk [vmem:[#allocation3 + $0xe0] sm:$0xff] %vm413, 0.0
        %475 = vst.msk [vmem:[#allocation3 + $0xe8] sm:$0xff] %vm413, 0.0
        %476 = vst.msk [vmem:[#allocation3 + $0xf0] sm:$0xff] %vm413, 0.0
        %477 = vst.msk [vmem:[#allocation3 + $0xf8] sm:$0xff] %vm413, 0.0
        %vm478 = vcmask 523264
        %479 = vst.msk [vmem:[#allocation4] sm:$0xff] %vm478, 0.0
        %480 = vst.msk [vmem:[#allocation4 + $0x8] sm:$0xff] %vm478, 0.0
        %481 = vst.msk [vmem:[#allocation4 + $0x10] sm:$0xff] %vm478, 0.0
        %482 = vst.msk [vmem:[#allocation4 + $0x18] sm:$0xff] %vm478, 0.0
        %483 = vst.msk [vmem:[#allocation4 + $0x20] sm:$0xff] %vm478, 0.0
        %484 = vst.msk [vmem:[#allocation4 + $0x28] sm:$0xff] %vm478, 0.0
        %485 = vst.msk [vmem:[#allocation4 + $0x30] sm:$0xff] %vm478, 0.0
        %486 = vst.msk [vmem:[#allocation4 + $0x38] sm:$0xff] %vm478, 0.0
        %487 = vst.msk [vmem:[#allocation4 + $0x40] sm:$0xff] %vm478, 0.0
        %488 = vst.msk [vmem:[#allocation4 + $0x48] sm:$0xff] %vm478, 0.0
        %489 = vst.msk [vmem:[#allocation4 + $0x50] sm:$0xff] %vm478, 0.0
        %490 = vst.msk [vmem:[#allocation4 + $0x58] sm:$0xff] %vm478, 0.0
        %491 = vst.msk [vmem:[#allocation4 + $0x60] sm:$0xff] %vm478, 0.0
        %492 = vst.msk [vmem:[#allocation4 + $0x68] sm:$0xff] %vm478, 0.0
        %493 = vst.msk [vmem:[#allocation4 + $0x70] sm:$0xff] %vm478, 0.0
        %494 = vst.msk [vmem:[#allocation4 + $0x78] sm:$0xff] %vm478, 0.0
        %495 = vst.msk [vmem:[#allocation4 + $0x80] sm:$0xff] %vm478, 0.0
        %496 = vst.msk [vmem:[#allocation4 + $0x88] sm:$0xff] %vm478, 0.0
        %497 = vst.msk [vmem:[#allocation4 + $0x90] sm:$0xff] %vm478, 0.0
        %498 = vst.msk [vmem:[#allocation4 + $0x98] sm:$0xff] %vm478, 0.0
        %499 = vst.msk [vmem:[#allocation4 + $0xa0] sm:$0xff] %vm478, 0.0
        %500 = vst.msk [vmem:[#allocation4 + $0xa8] sm:$0xff] %vm478, 0.0
        %501 = vst.msk [vmem:[#allocation4 + $0xb0] sm:$0xff] %vm478, 0.0
        %502 = vst.msk [vmem:[#allocation4 + $0xb8] sm:$0xff] %vm478, 0.0
        %503 = vst.msk [vmem:[#allocation4 + $0xc0] sm:$0xff] %vm478, 0.0
        %504 = vst.msk [vmem:[#allocation4 + $0xc8] sm:$0xff] %vm478, 0.0
        %505 = vst.msk [vmem:[#allocation4 + $0xd0] sm:$0xff] %vm478, 0.0
        %506 = vst.msk [vmem:[#allocation4 + $0xd8] sm:$0xff] %vm478, 0.0
        %507 = vst.msk [vmem:[#allocation4 + $0xe0] sm:$0xff] %vm478, 0.0
        %508 = vst.msk [vmem:[#allocation4 + $0xe8] sm:$0xff] %vm478, 0.0
        %509 = vst.msk [vmem:[#allocation4 + $0xf0] sm:$0xff] %vm478, 0.0
        %510 = vst.msk [vmem:[#allocation4 + $0xf8] sm:$0xff] %vm478, 0.0
      $region48: #{tpu_custom_call.1} parent=43 // pred_fallthru
        _
      %v511 = vld [vmem:[%s366] sm:$0xf]
      %v512 = vld [vmem:[%s366 + $0x4] sm:$0xf]
      %v513 = vld [vmem:[%s366 + $0x8] sm:$0xf]
      %v514 = vld [vmem:[%s366 + $0xc] sm:$0xf]
      %v515 = vld [vmem:[%s366 + $0x10] sm:$0xf]
      %v516 = vld [vmem:[%s366 + $0x14] sm:$0xf]
      %v517 = vld [vmem:[%s366 + $0x18] sm:$0xf]
      %v518 = vld [vmem:[%s366 + $0x1c] sm:$0xf]
      %v519 = vld [vmem:[%s366 + $0x20] sm:$0xf]
      %v520 = vld [vmem:[%s366 + $0x24] sm:$0xf]
      %v521 = vld [vmem:[%s366 + $0x28] sm:$0xf]
      %v522 = vld [vmem:[%s366 + $0x2c] sm:$0xf]
      %v523 = vld [vmem:[%s366 + $0x30] sm:$0xf]
      %v524 = vld [vmem:[%s366 + $0x34] sm:$0xf]
      %v525 = vld [vmem:[%s366 + $0x38] sm:$0xf]
      %v526 = vld [vmem:[%s366 + $0x3c] sm:$0xf]
      %v527 = vld [vmem:[%s366 + $0x40] sm:$0xf]
      %v528 = vld [vmem:[%s366 + $0x44] sm:$0xf]
      %v529 = vld [vmem:[%s366 + $0x48] sm:$0xf]
      %v530 = vld [vmem:[%s366 + $0x4c] sm:$0xf]
      %v531 = vld [vmem:[%s366 + $0x50] sm:$0xf]
      %v532 = vld [vmem:[%s366 + $0x54] sm:$0xf]
      %v533 = vld [vmem:[%s366 + $0x58] sm:$0xf]
      %v534 = vld [vmem:[%s366 + $0x5c] sm:$0xf]
      %v535 = vld [vmem:[%s366 + $0x60] sm:$0xf]
      %v536 = vld [vmem:[%s366 + $0x64] sm:$0xf]
      %v537 = vld [vmem:[%s366 + $0x68] sm:$0xf]
      %v538 = vld [vmem:[%s366 + $0x6c] sm:$0xf]
      %v539 = vld [vmem:[%s366 + $0x70] sm:$0xf]
      %v540 = vld [vmem:[%s366 + $0x74] sm:$0xf]
      %v541 = vld [vmem:[%s366 + $0x78] sm:$0xf]
      %v542 = vld [vmem:[%s366 + $0x7c] sm:$0xf]
      %v543 = vld [vmem:[%s376] sm:$0xff]
      %v576 = vunpack.c.l.b16 %v511
      %v577 = vunpack.c.l.b16 %v512
      %v578 = vunpack.c.l.b16 %v513
      %v579 = vunpack.c.l.b16 %v514
      %v580 = vunpack.c.l.b16 %v515
      %v581 = vunpack.c.l.b16 %v516
      %v582 = vunpack.c.l.b16 %v517
      %v583 = vunpack.c.l.b16 %v518
      %v584 = vunpack.c.l.b16 %v519
      %v585 = vunpack.c.l.b16 %v520
      %v586 = vunpack.c.l.b16 %v521
      %v587 = vunpack.c.l.b16 %v522
      %v588 = vunpack.c.l.b16 %v523
      %v589 = vunpack.c.l.b16 %v524
      %v590 = vunpack.c.l.b16 %v525
      %v591 = vunpack.c.l.b16 %v526
      %v592 = vunpack.c.l.b16 %v527
      %v593 = vunpack.c.l.b16 %v528
      %v594 = vunpack.c.l.b16 %v529
      %v595 = vunpack.c.l.b16 %v530
      %v596 = vunpack.c.l.b16 %v531
      %v597 = vunpack.c.l.b16 %v532
      %v598 = vunpack.c.l.b16 %v533
      %v599 = vunpack.c.l.b16 %v534
      %v600 = vunpack.c.l.b16 %v535
      %v601 = vunpack.c.l.b16 %v536
      %v602 = vunpack.c.l.b16 %v537
      %v603 = vunpack.c.l.b16 %v538
      %v604 = vunpack.c.l.b16 %v539
      %v605 = vunpack.c.l.b16 %v540
      %v606 = vunpack.c.l.b16 %v541
      %v607 = vunpack.c.l.b16 %v542
      %v608 = vpack.c.b16 %v577, %v576
      %v609 = vpack.c.b16 %v579, %v578
      %v610 = vpack.c.b16 %v581, %v580
      %v611 = vpack.c.b16 %v583, %v582
      %v612 = vpack.c.b16 %v585, %v584
      %v613 = vpack.c.b16 %v587, %v586
      %v614 = vpack.c.b16 %v589, %v588
      %v615 = vpack.c.b16 %v591, %v590
      %v616 = vpack.c.b16 %v593, %v592
      %v617 = vpack.c.b16 %v595, %v594
      %v618 = vpack.c.b16 %v597, %v596
      %v619 = vpack.c.b16 %v599, %v598
      %v620 = vpack.c.b16 %v601, %v600
      %v621 = vpack.c.b16 %v603, %v602
      %v622 = vpack.c.b16 %v605, %v604
      %v623 = vpack.c.b16 %v607, %v606
      %v625 = vunpack.c.l.b16 %v543
      %v626 = vunpack.c.h.b16 %v543
      %v627 = vpack.c.b16 %v625, %v625
      %v628 = vpack.c.b16 %v626, %v626
      %vm629 = vcmask 64512
      %v631 = vsel %vm629, %v608, 0
      %v634 = vsel %vm629, %v609, 0
      %v637 = vsel %vm629, %v610, 0
      %v640 = vsel %vm629, %v611, 0
      %v643 = vsel %vm629, %v612, 0
      %v646 = vsel %vm629, %v613, 0
      %v649 = vsel %vm629, %v614, 0
      %v652 = vsel %vm629, %v615, 0
      %v655 = vsel %vm629, %v616, 0
      %v658 = vsel %vm629, %v617, 0
      %v661 = vsel %vm629, %v618, 0
      %v664 = vsel %vm629, %v619, 0
      %v667 = vsel %vm629, %v620, 0
      %v670 = vsel %vm629, %v621, 0
      %v673 = vsel %vm629, %v622, 0
      %v676 = vsel %vm629, %v623, 0
      %vm678 = vcmask 1043456
      %v680 = vsel %vm678, %v627, 0
      %v683 = vsel %vm678, %v628, 0
      %685 = vmatpush.bf16.msra.mxu0 0
      %686 = vmatpush.bf16.msra.mxu0 0
      %687 = vmatpush.bf16.msra.mxu0 0
      %688 = vmatpush.bf16.msra.mxu0 0
      %689 = vmatpush.bf16.msra.mxu0 0
      %690 = vmatpush.bf16.msra.mxu0 0
      %691 = vmatpush.bf16.msra.mxu0 0
      %692 = vmatpush.bf16.msra.mxu0 %v680
      %693 = vmatmul.bf16.gmra.mxu0 %v631
      %v694 = vpop.f32.mrf.mxu0
      %v695 = vadd.f32 0.0, %v694
      %v696 = vpop.f32.mrf.mxu0
      %v697 = vadd.f32 0.0, %v696
      %698 = vmatmul.bf16.gmra.mxu0 %v634
      %v699 = vpop.f32.mrf.mxu0
      %v700 = vadd.f32 0.0, %v699
      %v701 = vpop.f32.mrf.mxu0
      %v702 = vadd.f32 0.0, %v701
      %703 = vmatmul.bf16.gmra.mxu0 %v637
      %v704 = vpop.f32.mrf.mxu0
      %v705 = vadd.f32 0.0, %v704
      %v706 = vpop.f32.mrf.mxu0
      %v707 = vadd.f32 0.0, %v706
      %708 = vmatmul.bf16.gmra.mxu0 %v640
      %v709 = vpop.f32.mrf.mxu0
      %v710 = vadd.f32 0.0, %v709
      %v711 = vpop.f32.mrf.mxu0
      %v712 = vadd.f32 0.0, %v711
      %713 = vmatmul.bf16.gmra.mxu0 %v643
      %v714 = vpop.f32.mrf.mxu0
      %v715 = vadd.f32 0.0, %v714
      %v716 = vpop.f32.mrf.mxu0
      %v717 = vadd.f32 0.0, %v716
      %718 = vmatmul.bf16.gmra.mxu0 %v646
      %v719 = vpop.f32.mrf.mxu0
      %v720 = vadd.f32 0.0, %v719
      %v721 = vpop.f32.mrf.mxu0
      %v722 = vadd.f32 0.0, %v721
      %723 = vmatmul.bf16.gmra.mxu0 %v649
      %v724 = vpop.f32.mrf.mxu0
      %v725 = vadd.f32 0.0, %v724
      %v726 = vpop.f32.mrf.mxu0
      %v727 = vadd.f32 0.0, %v726
      %728 = vmatmul.bf16.gmra.mxu0 %v652
      %v729 = vpop.f32.mrf.mxu0
      %v730 = vadd.f32 0.0, %v729
      %v731 = vpop.f32.mrf.mxu0
      %v732 = vadd.f32 0.0, %v731
      %733 = vmatmul.bf16.gmra.mxu0 %v655
      %v734 = vpop.f32.mrf.mxu0
      %v735 = vadd.f32 0.0, %v734
      %v736 = vpop.f32.mrf.mxu0
      %v737 = vadd.f32 0.0, %v736
      %738 = vmatmul.bf16.gmra.mxu0 %v658
      %v739 = vpop.f32.mrf.mxu0
      %v740 = vadd.f32 0.0, %v739
      %v741 = vpop.f32.mrf.mxu0
      %v742 = vadd.f32 0.0, %v741
      %743 = vmatmul.bf16.gmra.mxu0 %v661
      %v744 = vpop.f32.mrf.mxu0
      %v745 = vadd.f32 0.0, %v744
      %v746 = vpop.f32.mrf.mxu0
      %v747 = vadd.f32 0.0, %v746
      %748 = vmatmul.bf16.gmra.mxu0 %v664
      %v749 = vpop.f32.mrf.mxu0
      %v750 = vadd.f32 0.0, %v749
      %v751 = vpop.f32.mrf.mxu0
      %v752 = vadd.f32 0.0, %v751
      %753 = vmatmul.bf16.gmra.mxu0 %v667
      %v754 = vpop.f32.mrf.mxu0
      %v755 = vadd.f32 0.0, %v754
      %v756 = vpop.f32.mrf.mxu0
      %v757 = vadd.f32 0.0, %v756
      %758 = vmatmul.bf16.gmra.mxu0 %v670
      %v759 = vpop.f32.mrf.mxu0
      %v760 = vadd.f32 0.0, %v759
      %v761 = vpop.f32.mrf.mxu0
      %v762 = vadd.f32 0.0, %v761
      %763 = vmatmul.bf16.gmra.mxu0 %v673
      %v764 = vpop.f32.mrf.mxu0
      %v765 = vadd.f32 0.0, %v764
      %v766 = vpop.f32.mrf.mxu0
      %v767 = vadd.f32 0.0, %v766
      %768 = vmatmul.bf16.gmra.mxu0 %v676
      %v769 = vpop.f32.mrf.mxu0
      %v770 = vadd.f32 0.0, %v769
      %v771 = vpop.f32.mrf.mxu0
      %v772 = vadd.f32 0.0, %v771
      %773 = vdwg.mxu0
      %774 = vmatpush.bf16.msra.mxu0 0
      %775 = vmatpush.bf16.msra.mxu0 0
      %776 = vmatpush.bf16.msra.mxu0 0
      %777 = vmatpush.bf16.msra.mxu0 0
      %778 = vmatpush.bf16.msra.mxu0 0
      %779 = vmatpush.bf16.msra.mxu0 0
      %780 = vmatpush.bf16.msra.mxu0 0
      %781 = vmatpush.bf16.msra.mxu0 %v683
      %782 = vmatmul.bf16.gmra.mxu0 %v631
      %v783 = vpop.f32.mrf.mxu0
      %v784 = vadd.f32 0.0, %v783
      %v785 = vpop.f32.mrf.mxu0
      %v786 = vadd.f32 0.0, %v785
      %787 = vmatmul.bf16.gmra.mxu0 %v634
      %v788 = vpop.f32.mrf.mxu0
      %v789 = vadd.f32 0.0, %v788
      %v790 = vpop.f32.mrf.mxu0
      %v791 = vadd.f32 0.0, %v790
      %792 = vmatmul.bf16.gmra.mxu0 %v637
      %v793 = vpop.f32.mrf.mxu0
      %v794 = vadd.f32 0.0, %v793
      %v795 = vpop.f32.mrf.mxu0
      %v796 = vadd.f32 0.0, %v795
      %797 = vmatmul.bf16.gmra.mxu0 %v640
      %v798 = vpop.f32.mrf.mxu0
      %v799 = vadd.f32 0.0, %v798
      %v800 = vpop.f32.mrf.mxu0
      %v801 = vadd.f32 0.0, %v800
      %802 = vmatmul.bf16.gmra.mxu0 %v643
      %v803 = vpop.f32.mrf.mxu0
      %v804 = vadd.f32 0.0, %v803
      %v805 = vpop.f32.mrf.mxu0
      %v806 = vadd.f32 0.0, %v805
      %807 = vmatmul.bf16.gmra.mxu0 %v646
      %v808 = vpop.f32.mrf.mxu0
      %v809 = vadd.f32 0.0, %v808
      %v810 = vpop.f32.mrf.mxu0
      %v811 = vadd.f32 0.0, %v810
      %812 = vmatmul.bf16.gmra.mxu0 %v649
      %v813 = vpop.f32.mrf.mxu0
      %v814 = vadd.f32 0.0, %v813
      %v815 = vpop.f32.mrf.mxu0
      %v816 = vadd.f32 0.0, %v815
      %817 = vmatmul.bf16.gmra.mxu0 %v652
      %v818 = vpop.f32.mrf.mxu0
      %v819 = vadd.f32 0.0, %v818
      %v820 = vpop.f32.mrf.mxu0
      %v821 = vadd.f32 0.0, %v820
      %822 = vmatmul.bf16.gmra.mxu0 %v655
      %v823 = vpop.f32.mrf.mxu0
      %v824 = vadd.f32 0.0, %v823
      %v825 = vpop.f32.mrf.mxu0
      %v826 = vadd.f32 0.0, %v825
      %827 = vmatmul.bf16.gmra.mxu0 %v658
      %v828 = vpop.f32.mrf.mxu0
      %v829 = vadd.f32 0.0, %v828
      %v830 = vpop.f32.mrf.mxu0
      %v831 = vadd.f32 0.0, %v830
      %832 = vmatmul.bf16.gmra.mxu0 %v661
      %v833 = vpop.f32.mrf.mxu0
      %v834 = vadd.f32 0.0, %v833
      %v835 = vpop.f32.mrf.mxu0
      %v836 = vadd.f32 0.0, %v835
      %837 = vmatmul.bf16.gmra.mxu0 %v664
      %v838 = vpop.f32.mrf.mxu0
      %v839 = vadd.f32 0.0, %v838
      %v840 = vpop.f32.mrf.mxu0
      %v841 = vadd.f32 0.0, %v840
      %842 = vmatmul.bf16.gmra.mxu0 %v667
      %v843 = vpop.f32.mrf.mxu0
      %v844 = vadd.f32 0.0, %v843
      %v845 = vpop.f32.mrf.mxu0
      %v846 = vadd.f32 0.0, %v845
      %847 = vmatmul.bf16.gmra.mxu0 %v670
      %v848 = vpop.f32.mrf.mxu0
      %v849 = vadd.f32 0.0, %v848
      %v850 = vpop.f32.mrf.mxu0
      %v851 = vadd.f32 0.0, %v850
      %852 = vmatmul.bf16.gmra.mxu0 %v673
      %v853 = vpop.f32.mrf.mxu0
      %v854 = vadd.f32 0.0, %v853
      %v855 = vpop.f32.mrf.mxu0
      %v856 = vadd.f32 0.0, %v855
      %857 = vmatmul.bf16.gmra.mxu0 %v676
      %v858 = vpop.f32.mrf.mxu0
      %v859 = vadd.f32 0.0, %v858
      %v860 = vpop.f32.mrf.mxu0
      %v861 = vadd.f32 0.0, %v860
      %862 = vdwg.mxu0
      %v863 = vld [vmem:[#allocation2] sm:$0xff]
      %v864 = vld [vmem:[#allocation2 + $0x8] sm:$0xff]
      %v865 = vld [vmem:[#allocation2 + $0x10] sm:$0xff]
      %v866 = vld [vmem:[#allocation2 + $0x18] sm:$0xff]
      %v867 = vld [vmem:[#allocation2 + $0x20] sm:$0xff]
      %v868 = vld [vmem:[#allocation2 + $0x28] sm:$0xff]
      %v869 = vld [vmem:[#allocation2 + $0x30] sm:$0xff]
      %v870 = vld [vmem:[#allocation2 + $0x38] sm:$0xff]
      %v871 = vld [vmem:[#allocation2 + $0x40] sm:$0xff]
      %v872 = vld [vmem:[#allocation2 + $0x48] sm:$0xff]
      %v873 = vld [vmem:[#allocation2 + $0x50] sm:$0xff]
      %v874 = vld [vmem:[#allocation2 + $0x58] sm:$0xff]
      %v875 = vld [vmem:[#allocation2 + $0x60] sm:$0xff]
      %v876 = vld [vmem:[#allocation2 + $0x68] sm:$0xff]
      %v877 = vld [vmem:[#allocation2 + $0x70] sm:$0xff]
      %v878 = vld [vmem:[#allocation2 + $0x78] sm:$0xff]
      %v879 = vld [vmem:[#allocation2 + $0x80] sm:$0xff]
      %v880 = vld [vmem:[#allocation2 + $0x88] sm:$0xff]
      %v881 = vld [vmem:[#allocation2 + $0x90] sm:$0xff]
      %v882 = vld [vmem:[#allocation2 + $0x98] sm:$0xff]
      %v883 = vld [vmem:[#allocation2 + $0xa0] sm:$0xff]
      %v884 = vld [vmem:[#allocation2 + $0xa8] sm:$0xff]
      %v885 = vld [vmem:[#allocation2 + $0xb0] sm:$0xff]
      %v886 = vld [vmem:[#allocation2 + $0xb8] sm:$0xff]
      %v887 = vld [vmem:[#allocation2 + $0xc0] sm:$0xff]
      %v888 = vld [vmem:[#allocation2 + $0xc8] sm:$0xff]
      %v889 = vld [vmem:[#allocation2 + $0xd0] sm:$0xff]
      %v890 = vld [vmem:[#allocation2 + $0xd8] sm:$0xff]
      %v891 = vld [vmem:[#allocation2 + $0xe0] sm:$0xff]
      %v892 = vld [vmem:[#allocation2 + $0xe8] sm:$0xff]
      %v893 = vld [vmem:[#allocation2 + $0xf0] sm:$0xff]
      %v894 = vld [vmem:[#allocation2 + $0xf8] sm:$0xff]
      %v895 = vmax.f32 %v695, %v784
      %896 = vmax.xlane.f32.xlu0 %v895
      %v897 = vpop.xlane.xlu0 %896
      %v898 = vmax.f32 %v697, %v786
      %899 = vmax.xlane.f32.xlu0 %v898
      %v900 = vpop.xlane.xlu0 %899
      %v901 = vmax.f32 %v700, %v789
      %902 = vmax.xlane.f32.xlu0 %v901
      %v903 = vpop.xlane.xlu0 %902
      %v904 = vmax.f32 %v702, %v791
      %905 = vmax.xlane.f32.xlu0 %v904
      %v906 = vpop.xlane.xlu0 %905
      %v907 = vmax.f32 %v705, %v794
      %908 = vmax.xlane.f32.xlu0 %v907
      %v909 = vpop.xlane.xlu0 %908
      %v910 = vmax.f32 %v707, %v796
      %911 = vmax.xlane.f32.xlu0 %v910
      %v912 = vpop.xlane.xlu0 %911
      %v913 = vmax.f32 %v710, %v799
      %914 = vmax.xlane.f32.xlu0 %v913
      %v915 = vpop.xlane.xlu0 %914
      %v916 = vmax.f32 %v712, %v801
      %917 = vmax.xlane.f32.xlu0 %v916
      %v918 = vpop.xlane.xlu0 %917
      %v919 = vmax.f32 %v715, %v804
      %920 = vmax.xlane.f32.xlu0 %v919
      %v921 = vpop.xlane.xlu0 %920
      %v922 = vmax.f32 %v717, %v806
      %923 = vmax.xlane.f32.xlu0 %v922
      %v924 = vpop.xlane.xlu0 %923
      %v925 = vmax.f32 %v720, %v809
      %926 = vmax.xlane.f32.xlu0 %v925
      %v927 = vpop.xlane.xlu0 %926
      %v928 = vmax.f32 %v722, %v811
      %929 = vmax.xlane.f32.xlu0 %v928
      %v930 = vpop.xlane.xlu0 %929
      %v931 = vmax.f32 %v725, %v814
      %932 = vmax.xlane.f32.xlu0 %v931
      %v933 = vpop.xlane.xlu0 %932
      %v934 = vmax.f32 %v727, %v816
      %935 = vmax.xlane.f32.xlu0 %v934
      %v936 = vpop.xlane.xlu0 %935
      %v937 = vmax.f32 %v730, %v819
      %938 = vmax.xlane.f32.xlu0 %v937
      %v939 = vpop.xlane.xlu0 %938
      %v940 = vmax.f32 %v732, %v821
      %941 = vmax.xlane.f32.xlu0 %v940
      %v942 = vpop.xlane.xlu0 %941
      %v943 = vmax.f32 %v735, %v824
      %944 = vmax.xlane.f32.xlu0 %v943
      %v945 = vpop.xlane.xlu0 %944
      %v946 = vmax.f32 %v737, %v826
      %947 = vmax.xlane.f32.xlu0 %v946
      %v948 = vpop.xlane.xlu0 %947
      %v949 = vmax.f32 %v740, %v829
      %950 = vmax.xlane.f32.xlu0 %v949
      %v951 = vpop.xlane.xlu0 %950
      %v952 = vmax.f32 %v742, %v831
      %953 = vmax.xlane.f32.xlu0 %v952
      %v954 = vpop.xlane.xlu0 %953
      %v955 = vmax.f32 %v745, %v834
      %956 = vmax.xlane.f32.xlu0 %v955
      %v957 = vpop.xlane.xlu0 %956
      %v958 = vmax.f32 %v747, %v836
      %959 = vmax.xlane.f32.xlu0 %v958
      %v960 = vpop.xlane.xlu0 %959
      %v961 = vmax.f32 %v750, %v839
      %962 = vmax.xlane.f32.xlu0 %v961
      %v963 = vpop.xlane.xlu0 %962
      %v964 = vmax.f32 %v752, %v841
      %965 = vmax.xlane.f32.xlu0 %v964
      %v966 = vpop.xlane.xlu0 %965
      %v967 = vmax.f32 %v755, %v844
      %968 = vmax.xlane.f32.xlu0 %v967
      %v969 = vpop.xlane.xlu0 %968
      %v970 = vmax.f32 %v757, %v846
      %971 = vmax.xlane.f32.xlu0 %v970
      %v972 = vpop.xlane.xlu0 %971
      %v973 = vmax.f32 %v760, %v849
      %974 = vmax.xlane.f32.xlu0 %v973
      %v975 = vpop.xlane.xlu0 %974
      %v976 = vmax.f32 %v762, %v851
      %977 = vmax.xlane.f32.xlu0 %v976
      %v978 = vpop.xlane.xlu0 %977
      %v979 = vmax.f32 %v765, %v854
      %980 = vmax.xlane.f32.xlu0 %v979
      %v981 = vpop.xlane.xlu0 %980
      %v982 = vmax.f32 %v767, %v856
      %983 = vmax.xlane.f32.xlu0 %v982
      %v984 = vpop.xlane.xlu0 %983
      %v985 = vmax.f32 %v770, %v859
      %986 = vmax.xlane.f32.xlu0 %v985
      %v987 = vpop.xlane.xlu0 %986
      %v988 = vmax.f32 %v772, %v861
      %989 = vmax.xlane.f32.xlu0 %v988
      %v990 = vpop.xlane.xlu0 %989
      %v991 = vmax.f32 %v863, %v897
      %v992 = vmax.f32 %v864, %v900
      %v993 = vmax.f32 %v865, %v903
      %v994 = vmax.f32 %v866, %v906
      %v995 = vmax.f32 %v867, %v909
      %v996 = vmax.f32 %v868, %v912
      %v997 = vmax.f32 %v869, %v915
      %v998 = vmax.f32 %v870, %v918
      %v999 = vmax.f32 %v871, %v921
      %v1000 = vmax.f32 %v872, %v924
      %v1001 = vmax.f32 %v873, %v927
      %v1002 = vmax.f32 %v874, %v930
      %v1003 = vmax.f32 %v875, %v933
      %v1004 = vmax.f32 %v876, %v936
      %v1005 = vmax.f32 %v877, %v939
      %v1006 = vmax.f32 %v878, %v942
      %v1007 = vmax.f32 %v879, %v945
      %v1008 = vmax.f32 %v880, %v948
      %v1009 = vmax.f32 %v881, %v951
      %v1010 = vmax.f32 %v882, %v954
      %v1011 = vmax.f32 %v883, %v957
      %v1012 = vmax.f32 %v884, %v960
      %v1013 = vmax.f32 %v885, %v963
      %v1014 = vmax.f32 %v886, %v966
      %v1015 = vmax.f32 %v887, %v969
      %v1016 = vmax.f32 %v888, %v972
      %v1017 = vmax.f32 %v889, %v975
      %v1018 = vmax.f32 %v890, %v978
      %v1019 = vmax.f32 %v891, %v981
      %v1020 = vmax.f32 %v892, %v984
      %v1021 = vmax.f32 %v893, %v987
      %v1022 = vmax.f32 %v894, %v990
      %v1023 = vsub.f32 %v863, %v991
      %v1024 = vsub.f32 %v864, %v992
      %v1025 = vsub.f32 %v865, %v993
      %v1026 = vsub.f32 %v866, %v994
      %v1027 = vsub.f32 %v867, %v995
      %v1028 = vsub.f32 %v868, %v996
      %v1029 = vsub.f32 %v869, %v997
      %v1030 = vsub.f32 %v870, %v998
      %v1031 = vsub.f32 %v871, %v999
      %v1032 = vsub.f32 %v872, %v1000
      %v1033 = vsub.f32 %v873, %v1001
      %v1034 = vsub.f32 %v874, %v1002
      %v1035 = vsub.f32 %v875, %v1003
      %v1036 = vsub.f32 %v876, %v1004
      %v1037 = vsub.f32 %v877, %v1005
      %v1038 = vsub.f32 %v878, %v1006
      %v1039 = vsub.f32 %v879, %v1007
      %v1040 = vsub.f32 %v880, %v1008
      %v1041 = vsub.f32 %v881, %v1009
      %v1042 = vsub.f32 %v882, %v1010
      %v1043 = vsub.f32 %v883, %v1011
      %v1044 = vsub.f32 %v884, %v1012
      %v1045 = vsub.f32 %v885, %v1013
      %v1046 = vsub.f32 %v886, %v1014
      %v1047 = vsub.f32 %v887, %v1015
      %v1048 = vsub.f32 %v888, %v1016
      %v1049 = vsub.f32 %v889, %v1017
      %v1050 = vsub.f32 %v890, %v1018
      %v1051 = vsub.f32 %v891, %v1019
      %v1052 = vsub.f32 %v892, %v1020
      %v1053 = vsub.f32 %v893, %v1021
      %v1054 = vsub.f32 %v894, %v1022
      %v1055 = vmul.f32 %v1023, 1.442695
      %v1056 = vpow.pop %v1055
      %v1057 = vmul.f32 %v1024, 1.442695
      %v1058 = vpow.pop %v1057
      %v1059 = vmul.f32 %v1025, 1.442695
      %v1060 = vpow.pop %v1059
      %v1061 = vmul.f32 %v1026, 1.442695
      %v1062 = vpow.pop %v1061
      %v1063 = vmul.f32 %v1027, 1.442695
      %v1064 = vpow.pop %v1063
      %v1065 = vmul.f32 %v1028, 1.442695
      %v1066 = vpow.pop %v1065
      %v1067 = vmul.f32 %v1029, 1.442695
      %v1068 = vpow.pop %v1067
      %v1069 = vmul.f32 %v1030, 1.442695
      %v1070 = vpow.pop %v1069
      %v1071 = vmul.f32 %v1031, 1.442695
      %v1072 = vpow.pop %v1071
      %v1073 = vmul.f32 %v1032, 1.442695
      %v1074 = vpow.pop %v1073
      %v1075 = vmul.f32 %v1033, 1.442695
      %v1076 = vpow.pop %v1075
      %v1077 = vmul.f32 %v1034, 1.442695
      %v1078 = vpow.pop %v1077
      %v1079 = vmul.f32 %v1035, 1.442695
      %v1080 = vpow.pop %v1079
      %v1081 = vmul.f32 %v1036, 1.442695
      %v1082 = vpow.pop %v1081
      %v1083 = vmul.f32 %v1037, 1.442695
      %v1084 = vpow.pop %v1083
      %v1085 = vmul.f32 %v1038, 1.442695
      %v1086 = vpow.pop %v1085
      %v1087 = vmul.f32 %v1039, 1.442695
      %v1088 = vpow.pop %v1087
      %v1089 = vmul.f32 %v1040, 1.442695
      %v1090 = vpow.pop %v1089
      %v1091 = vmul.f32 %v1041, 1.442695
      %v1092 = vpow.pop %v1091
      %v1093 = vmul.f32 %v1042, 1.442695
      %v1094 = vpow.pop %v1093
      %v1095 = vmul.f32 %v1043, 1.442695
      %v1096 = vpow.pop %v1095
      %v1097 = vmul.f32 %v1044, 1.442695
      %v1098 = vpow.pop %v1097
      %v1099 = vmul.f32 %v1045, 1.442695
      %v1100 = vpow.pop %v1099
      %v1101 = vmul.f32 %v1046, 1.442695
      %v1102 = vpow.pop %v1101
      %v1103 = vmul.f32 %v1047, 1.442695
      %v1104 = vpow.pop %v1103
      %v1105 = vmul.f32 %v1048, 1.442695
      %v1106 = vpow.pop %v1105
      %v1107 = vmul.f32 %v1049, 1.442695
      %v1108 = vpow.pop %v1107
      %v1109 = vmul.f32 %v1050, 1.442695
      %v1110 = vpow.pop %v1109
      %v1111 = vmul.f32 %v1051, 1.442695
      %v1112 = vpow.pop %v1111
      %v1113 = vmul.f32 %v1052, 1.442695
      %v1114 = vpow.pop %v1113
      %v1115 = vmul.f32 %v1053, 1.442695
      %v1116 = vpow.pop %v1115
      %v1117 = vmul.f32 %v1054, 1.442695
      %v1118 = vpow.pop %v1117
      %1120 = vset.pattern.permute.xlu0 0
      %1121 = vperm.xlu0 %1120, %v991
      %v1122 = vpop.permute.xlu0 %1121
      %1125 = vset.pattern.permute.xlu0 0
      %1126 = vperm.xlu0 %1125, %v992
      %v1127 = vpop.permute.xlu0 %1126
      %1130 = vset.pattern.permute.xlu0 0
      %1131 = vperm.xlu0 %1130, %v993
      %v1132 = vpop.permute.xlu0 %1131
      %1135 = vset.pattern.permute.xlu0 0
      %1136 = vperm.xlu0 %1135, %v994
      %v1137 = vpop.permute.xlu0 %1136
      %1140 = vset.pattern.permute.xlu0 0
      %1141 = vperm.xlu0 %1140, %v995
      %v1142 = vpop.permute.xlu0 %1141
      %1145 = vset.pattern.permute.xlu0 0
      %1146 = vperm.xlu0 %1145, %v996
      %v1147 = vpop.permute.xlu0 %1146
      %1150 = vset.pattern.permute.xlu0 0
      %1151 = vperm.xlu0 %1150, %v997
      %v1152 = vpop.permute.xlu0 %1151
      %1155 = vset.pattern.permute.xlu0 0
      %1156 = vperm.xlu0 %1155, %v998
      %v1157 = vpop.permute.xlu0 %1156
      %1160 = vset.pattern.permute.xlu0 0
      %1161 = vperm.xlu0 %1160, %v999
      %v1162 = vpop.permute.xlu0 %1161
      %1165 = vset.pattern.permute.xlu0 0
      %1166 = vperm.xlu0 %1165, %v1000
      %v1167 = vpop.permute.xlu0 %1166
      %1170 = vset.pattern.permute.xlu0 0
      %1171 = vperm.xlu0 %1170, %v1001
      %v1172 = vpop.permute.xlu0 %1171
      %1175 = vset.pattern.permute.xlu0 0
      %1176 = vperm.xlu0 %1175, %v1002
      %v1177 = vpop.permute.xlu0 %1176
      %1180 = vset.pattern.permute.xlu0 0
      %1181 = vperm.xlu0 %1180, %v1003
      %v1182 = vpop.permute.xlu0 %1181
      %1185 = vset.pattern.permute.xlu0 0
      %1186 = vperm.xlu0 %1185, %v1004
      %v1187 = vpop.permute.xlu0 %1186
      %1190 = vset.pattern.permute.xlu0 0
      %1191 = vperm.xlu0 %1190, %v1005
      %v1192 = vpop.permute.xlu0 %1191
      %1195 = vset.pattern.permute.xlu0 0
      %1196 = vperm.xlu0 %1195, %v1006
      %v1197 = vpop.permute.xlu0 %1196
      %1200 = vset.pattern.permute.xlu0 0
      %1201 = vperm.xlu0 %1200, %v1007
      %v1202 = vpop.permute.xlu0 %1201
      %1205 = vset.pattern.permute.xlu0 0
      %1206 = vperm.xlu0 %1205, %v1008
      %v1207 = vpop.permute.xlu0 %1206
      %1210 = vset.pattern.permute.xlu0 0
      %1211 = vperm.xlu0 %1210, %v1009
      %v1212 = vpop.permute.xlu0 %1211
      %1215 = vset.pattern.permute.xlu0 0
      %1216 = vperm.xlu0 %1215, %v1010
      %v1217 = vpop.permute.xlu0 %1216
      %1220 = vset.pattern.permute.xlu0 0
      %1221 = vperm.xlu0 %1220, %v1011
      %v1222 = vpop.permute.xlu0 %1221
      %1225 = vset.pattern.permute.xlu0 0
      %1226 = vperm.xlu0 %1225, %v1012
      %v1227 = vpop.permute.xlu0 %1226
      %1230 = vset.pattern.permute.xlu0 0
      %1231 = vperm.xlu0 %1230, %v1013
      %v1232 = vpop.permute.xlu0 %1231
      %1235 = vset.pattern.permute.xlu0 0
      %1236 = vperm.xlu0 %1235, %v1014
      %v1237 = vpop.permute.xlu0 %1236
      %1240 = vset.pattern.permute.xlu0 0
      %1241 = vperm.xlu0 %1240, %v1015
      %v1242 = vpop.permute.xlu0 %1241
      %1245 = vset.pattern.permute.xlu0 0
      %1246 = vperm.xlu0 %1245, %v1016
      %v1247 = vpop.permute.xlu0 %1246
      %1250 = vset.pattern.permute.xlu0 0
      %1251 = vperm.xlu0 %1250, %v1017
      %v1252 = vpop.permute.xlu0 %1251
      %1255 = vset.pattern.permute.xlu0 0
      %1256 = vperm.xlu0 %1255, %v1018
      %v1257 = vpop.permute.xlu0 %1256
      %1260 = vset.pattern.permute.xlu0 0
      %1261 = vperm.xlu0 %1260, %v1019
      %v1262 = vpop.permute.xlu0 %1261
      %1265 = vset.pattern.permute.xlu0 0
      %1266 = vperm.xlu0 %1265, %v1020
      %v1267 = vpop.permute.xlu0 %1266
      %1270 = vset.pattern.permute.xlu0 0
      %1271 = vperm.xlu0 %1270, %v1021
      %v1272 = vpop.permute.xlu0 %1271
      %1275 = vset.pattern.permute.xlu0 0
      %1276 = vperm.xlu0 %1275, %v1022
      %v1277 = vpop.permute.xlu0 %1276
      %v1279 = vsub.f32 %v695, %v1122
      %v1280 = vsub.f32 %v784, %v1122
      %v1281 = vsub.f32 %v697, %v1127
      %v1282 = vsub.f32 %v786, %v1127
      %v1283 = vsub.f32 %v700, %v1132
      %v1284 = vsub.f32 %v789, %v1132
      %v1285 = vsub.f32 %v702, %v1137
      %v1286 = vsub.f32 %v791, %v1137
      %v1287 = vsub.f32 %v705, %v1142
      %v1288 = vsub.f32 %v794, %v1142
      %v1289 = vsub.f32 %v707, %v1147
      %v1290 = vsub.f32 %v796, %v1147
      %v1291 = vsub.f32 %v710, %v1152
      %v1292 = vsub.f32 %v799, %v1152
      %v1293 = vsub.f32 %v712, %v1157
      %v1294 = vsub.f32 %v801, %v1157
      %v1295 = vsub.f32 %v715, %v1162
      %v1296 = vsub.f32 %v804, %v1162
      %v1297 = vsub.f32 %v717, %v1167
      %v1298 = vsub.f32 %v806, %v1167
      %v1299 = vsub.f32 %v720, %v1172
      %v1300 = vsub.f32 %v809, %v1172
      %v1301 = vsub.f32 %v722, %v1177
      %v1302 = vsub.f32 %v811, %v1177
      %v1303 = vsub.f32 %v725, %v1182
      %v1304 = vsub.f32 %v814, %v1182
      %v1305 = vsub.f32 %v727, %v1187
      %v1306 = vsub.f32 %v816, %v1187
      %v1307 = vsub.f32 %v730, %v1192
      %v1308 = vsub.f32 %v819, %v1192
      %v1309 = vsub.f32 %v732, %v1197
      %v1310 = vsub.f32 %v821, %v1197
      %v1311 = vsub.f32 %v735, %v1202
      %v1312 = vsub.f32 %v824, %v1202
      %v1313 = vsub.f32 %v737, %v1207
      %v1314 = vsub.f32 %v826, %v1207
      %v1315 = vsub.f32 %v740, %v1212
      %v1316 = vsub.f32 %v829, %v1212
      %v1317 = vsub.f32 %v742, %v1217
      %v1318 = vsub.f32 %v831, %v1217
      %v1319 = vsub.f32 %v745, %v1222
      %v1320 = vsub.f32 %v834, %v1222
      %v1321 = vsub.f32 %v747, %v1227
      %v1322 = vsub.f32 %v836, %v1227
      %v1323 = vsub.f32 %v750, %v1232
      %v1324 = vsub.f32 %v839, %v1232
      %v1325 = vsub.f32 %v752, %v1237
      %v1326 = vsub.f32 %v841, %v1237
      %v1327 = vsub.f32 %v755, %v1242
      %v1328 = vsub.f32 %v844, %v1242
      %v1329 = vsub.f32 %v757, %v1247
      %v1330 = vsub.f32 %v846, %v1247
      %v1331 = vsub.f32 %v760, %v1252
      %v1332 = vsub.f32 %v849, %v1252
      %v1333 = vsub.f32 %v762, %v1257
      %v1334 = vsub.f32 %v851, %v1257
      %v1335 = vsub.f32 %v765, %v1262
      %v1336 = vsub.f32 %v854, %v1262
      %v1337 = vsub.f32 %v767, %v1267
      %v1338 = vsub.f32 %v856, %v1267
      %v1339 = vsub.f32 %v770, %v1272
      %v1340 = vsub.f32 %v859, %v1272
      %v1341 = vsub.f32 %v772, %v1277
      %v1342 = vsub.f32 %v861, %v1277
      %v1343 = vmul.f32 %v1279, 1.442695
      %v1344 = vpow.pop %v1343
      %v1345 = vmul.f32 %v1280, 1.442695
      %v1346 = vpow.pop %v1345
      %v1347 = vmul.f32 %v1281, 1.442695
      %v1348 = vpow.pop %v1347
      %v1349 = vmul.f32 %v1282, 1.442695
      %v1350 = vpow.pop %v1349
      %v1351 = vmul.f32 %v1283, 1.442695
      %v1352 = vpow.pop %v1351
      %v1353 = vmul.f32 %v1284, 1.442695
      %v1354 = vpow.pop %v1353
      %v1355 = vmul.f32 %v1285, 1.442695
      %v1356 = vpow.pop %v1355
      %v1357 = vmul.f32 %v1286, 1.442695
      %v1358 = vpow.pop %v1357
      %v1359 = vmul.f32 %v1287, 1.442695
      %v1360 = vpow.pop %v1359
      %v1361 = vmul.f32 %v1288, 1.442695
      %v1362 = vpow.pop %v1361
      %v1363 = vmul.f32 %v1289, 1.442695
      %v1364 = vpow.pop %v1363
      %v1365 = vmul.f32 %v1290, 1.442695
      %v1366 = vpow.pop %v1365
      %v1367 = vmul.f32 %v1291, 1.442695
      %v1368 = vpow.pop %v1367
      %v1369 = vmul.f32 %v1292, 1.442695
      %v1370 = vpow.pop %v1369
      %v1371 = vmul.f32 %v1293, 1.442695
      %v1372 = vpow.pop %v1371
      %v1373 = vmul.f32 %v1294, 1.442695
      %v1374 = vpow.pop %v1373
      %v1375 = vmul.f32 %v1295, 1.442695
      %v1376 = vpow.pop %v1375
      %v1377 = vmul.f32 %v1296, 1.442695
      %v1378 = vpow.pop %v1377
      %v1379 = vmul.f32 %v1297, 1.442695
      %v1380 = vpow.pop %v1379
      %v1381 = vmul.f32 %v1298, 1.442695
      %v1382 = vpow.pop %v1381
      %v1383 = vmul.f32 %v1299, 1.442695
      %v1384 = vpow.pop %v1383
      %v1385 = vmul.f32 %v1300, 1.442695
      %v1386 = vpow.pop %v1385
      %v1387 = vmul.f32 %v1301, 1.442695
      %v1388 = vpow.pop %v1387
      %v1389 = vmul.f32 %v1302, 1.442695
      %v1390 = vpow.pop %v1389
      %v1391 = vmul.f32 %v1303, 1.442695
      %v1392 = vpow.pop %v1391
      %v1393 = vmul.f32 %v1304, 1.442695
      %v1394 = vpow.pop %v1393
      %v1395 = vmul.f32 %v1305, 1.442695
      %v1396 = vpow.pop %v1395
      %v1397 = vmul.f32 %v1306, 1.442695
      %v1398 = vpow.pop %v1397
      %v1399 = vmul.f32 %v1307, 1.442695
      %v1400 = vpow.pop %v1399
      %v1401 = vmul.f32 %v1308, 1.442695
      %v1402 = vpow.pop %v1401
      %v1403 = vmul.f32 %v1309, 1.442695
      %v1404 = vpow.pop %v1403
      %v1405 = vmul.f32 %v1310, 1.442695
      %v1406 = vpow.pop %v1405
      %v1407 = vmul.f32 %v1311, 1.442695
      %v1408 = vpow.pop %v1407
      %v1409 = vmul.f32 %v1312, 1.442695
      %v1410 = vpow.pop %v1409
      %v1411 = vmul.f32 %v1313, 1.442695
      %v1412 = vpow.pop %v1411
      %v1413 = vmul.f32 %v1314, 1.442695
      %v1414 = vpow.pop %v1413
      %v1415 = vmul.f32 %v1315, 1.442695
      %v1416 = vpow.pop %v1415
      %v1417 = vmul.f32 %v1316, 1.442695
      %v1418 = vpow.pop %v1417
      %v1419 = vmul.f32 %v1317, 1.442695
      %v1420 = vpow.pop %v1419
      %v1421 = vmul.f32 %v1318, 1.442695
      %v1422 = vpow.pop %v1421
      %v1423 = vmul.f32 %v1319, 1.442695
      %v1424 = vpow.pop %v1423
      %v1425 = vmul.f32 %v1320, 1.442695
      %v1426 = vpow.pop %v1425
      %v1427 = vmul.f32 %v1321, 1.442695
      %v1428 = vpow.pop %v1427
      %v1429 = vmul.f32 %v1322, 1.442695
      %v1430 = vpow.pop %v1429
      %v1431 = vmul.f32 %v1323, 1.442695
      %v1432 = vpow.pop %v1431
      %v1433 = vmul.f32 %v1324, 1.442695
      %v1434 = vpow.pop %v1433
      %v1435 = vmul.f32 %v1325, 1.442695
      %v1436 = vpow.pop %v1435
      %v1437 = vmul.f32 %v1326, 1.442695
      %v1438 = vpow.pop %v1437
      %v1439 = vmul.f32 %v1327, 1.442695
      %v1440 = vpow.pop %v1439
      %v1441 = vmul.f32 %v1328, 1.442695
      %v1442 = vpow.pop %v1441
      %v1443 = vmul.f32 %v1329, 1.442695
      %v1444 = vpow.pop %v1443
      %v1445 = vmul.f32 %v1330, 1.442695
      %v1446 = vpow.pop %v1445
      %v1447 = vmul.f32 %v1331, 1.442695
      %v1448 = vpow.pop %v1447
      %v1449 = vmul.f32 %v1332, 1.442695
      %v1450 = vpow.pop %v1449
      %v1451 = vmul.f32 %v1333, 1.442695
      %v1452 = vpow.pop %v1451
      %v1453 = vmul.f32 %v1334, 1.442695
      %v1454 = vpow.pop %v1453
      %v1455 = vmul.f32 %v1335, 1.442695
      %v1456 = vpow.pop %v1455
      %v1457 = vmul.f32 %v1336, 1.442695
      %v1458 = vpow.pop %v1457
      %v1459 = vmul.f32 %v1337, 1.442695
      %v1460 = vpow.pop %v1459
      %v1461 = vmul.f32 %v1338, 1.442695
      %v1462 = vpow.pop %v1461
      %v1463 = vmul.f32 %v1339, 1.442695
      %v1464 = vpow.pop %v1463
      %v1465 = vmul.f32 %v1340, 1.442695
      %v1466 = vpow.pop %v1465
      %v1467 = vmul.f32 %v1341, 1.442695
      %v1468 = vpow.pop %v1467
      %v1469 = vmul.f32 %v1342, 1.442695
      %v1470 = vpow.pop %v1469
      %v1471 = vld [vmem:[#allocation3] sm:$0xff]
      %v1472 = vld [vmem:[#allocation3 + $0x8] sm:$0xff]
      %v1473 = vld [vmem:[#allocation3 + $0x10] sm:$0xff]
      %v1474 = vld [vmem:[#allocation3 + $0x18] sm:$0xff]
      %v1475 = vld [vmem:[#allocation3 + $0x20] sm:$0xff]
      %v1476 = vld [vmem:[#allocation3 + $0x28] sm:$0xff]
      %v1477 = vld [vmem:[#allocation3 + $0x30] sm:$0xff]
      %v1478 = vld [vmem:[#allocation3 + $0x38] sm:$0xff]
      %v1479 = vld [vmem:[#allocation3 + $0x40] sm:$0xff]
      %v1480 = vld [vmem:[#allocation3 + $0x48] sm:$0xff]
      %v1481 = vld [vmem:[#allocation3 + $0x50] sm:$0xff]
      %v1482 = vld [vmem:[#allocation3 + $0x58] sm:$0xff]
      %v1483 = vld [vmem:[#allocation3 + $0x60] sm:$0xff]
      %v1484 = vld [vmem:[#allocation3 + $0x68] sm:$0xff]
      %v1485 = vld [vmem:[#allocation3 + $0x70] sm:$0xff]
      %v1486 = vld [vmem:[#allocation3 + $0x78] sm:$0xff]
      %v1487 = vld [vmem:[#allocation3 + $0x80] sm:$0xff]
      %v1488 = vld [vmem:[#allocation3 + $0x88] sm:$0xff]
      %v1489 = vld [vmem:[#allocation3 + $0x90] sm:$0xff]
      %v1490 = vld [vmem:[#allocation3 + $0x98] sm:$0xff]
      %v1491 = vld [vmem:[#allocation3 + $0xa0] sm:$0xff]
      %v1492 = vld [vmem:[#allocation3 + $0xa8] sm:$0xff]
      %v1493 = vld [vmem:[#allocation3 + $0xb0] sm:$0xff]
      %v1494 = vld [vmem:[#allocation3 + $0xb8] sm:$0xff]
      %v1495 = vld [vmem:[#allocation3 + $0xc0] sm:$0xff]
      %v1496 = vld [vmem:[#allocation3 + $0xc8] sm:$0xff]
      %v1497 = vld [vmem:[#allocation3 + $0xd0] sm:$0xff]
      %v1498 = vld [vmem:[#allocation3 + $0xd8] sm:$0xff]
      %v1499 = vld [vmem:[#allocation3 + $0xe0] sm:$0xff]
      %v1500 = vld [vmem:[#allocation3 + $0xe8] sm:$0xff]
      %v1501 = vld [vmem:[#allocation3 + $0xf0] sm:$0xff]
      %v1502 = vld [vmem:[#allocation3 + $0xf8] sm:$0xff]
      %v1503 = vmul.f32 %v1056, %v1471
      %v1504 = vmul.f32 %v1058, %v1472
      %v1505 = vmul.f32 %v1060, %v1473
      %v1506 = vmul.f32 %v1062, %v1474
      %v1507 = vmul.f32 %v1064, %v1475
      %v1508 = vmul.f32 %v1066, %v1476
      %v1509 = vmul.f32 %v1068, %v1477
      %v1510 = vmul.f32 %v1070, %v1478
      %v1511 = vmul.f32 %v1072, %v1479
      %v1512 = vmul.f32 %v1074, %v1480
      %v1513 = vmul.f32 %v1076, %v1481
      %v1514 = vmul.f32 %v1078, %v1482
      %v1515 = vmul.f32 %v1080, %v1483
      %v1516 = vmul.f32 %v1082, %v1484
      %v1517 = vmul.f32 %v1084, %v1485
      %v1518 = vmul.f32 %v1086, %v1486
      %v1519 = vmul.f32 %v1088, %v1487
      %v1520 = vmul.f32 %v1090, %v1488
      %v1521 = vmul.f32 %v1092, %v1489
      %v1522 = vmul.f32 %v1094, %v1490
      %v1523 = vmul.f32 %v1096, %v1491
      %v1524 = vmul.f32 %v1098, %v1492
      %v1525 = vmul.f32 %v1100, %v1493
      %v1526 = vmul.f32 %v1102, %v1494
      %v1527 = vmul.f32 %v1104, %v1495
      %v1528 = vmul.f32 %v1106, %v1496
      %v1529 = vmul.f32 %v1108, %v1497
      %v1530 = vmul.f32 %v1110, %v1498
      %v1531 = vmul.f32 %v1112, %v1499
      %v1532 = vmul.f32 %v1114, %v1500
      %v1533 = vmul.f32 %v1116, %v1501
      %v1534 = vmul.f32 %v1118, %v1502
      %v1535 = vadd.f32 %v1344, %v1346
      %1536 = vadd.xlane.f32.xlu0 %v1535
      %v1537 = vpop.xlane.xlu0 %1536
      %v1538 = vadd.f32 %v1348, %v1350
      %1539 = vadd.xlane.f32.xlu0 %v1538
      %v1540 = vpop.xlane.xlu0 %1539
      %v1541 = vadd.f32 %v1352, %v1354
      %1542 = vadd.xlane.f32.xlu0 %v1541
      %v1543 = vpop.xlane.xlu0 %1542
      %v1544 = vadd.f32 %v1356, %v1358
      %1545 = vadd.xlane.f32.xlu0 %v1544
      %v1546 = vpop.xlane.xlu0 %1545
      %v1547 = vadd.f32 %v1360, %v1362
      %1548 = vadd.xlane.f32.xlu0 %v1547
      %v1549 = vpop.xlane.xlu0 %1548
      %v1550 = vadd.f32 %v1364, %v1366
      %1551 = vadd.xlane.f32.xlu0 %v1550
      %v1552 = vpop.xlane.xlu0 %1551
      %v1553 = vadd.f32 %v1368, %v1370
      %1554 = vadd.xlane.f32.xlu0 %v1553
      %v1555 = vpop.xlane.xlu0 %1554
      %v1556 = vadd.f32 %v1372, %v1374
      %1557 = vadd.xlane.f32.xlu0 %v1556
      %v1558 = vpop.xlane.xlu0 %1557
      %v1559 = vadd.f32 %v1376, %v1378
      %1560 = vadd.xlane.f32.xlu0 %v1559
      %v1561 = vpop.xlane.xlu0 %1560
      %v1562 = vadd.f32 %v1380, %v1382
      %1563 = vadd.xlane.f32.xlu0 %v1562
      %v1564 = vpop.xlane.xlu0 %1563
      %v1565 = vadd.f32 %v1384, %v1386
      %1566 = vadd.xlane.f32.xlu0 %v1565
      %v1567 = vpop.xlane.xlu0 %1566
      %v1568 = vadd.f32 %v1388, %v1390
      %1569 = vadd.xlane.f32.xlu0 %v1568
      %v1570 = vpop.xlane.xlu0 %1569
      %v1571 = vadd.f32 %v1392, %v1394
      %1572 = vadd.xlane.f32.xlu0 %v1571
      %v1573 = vpop.xlane.xlu0 %1572
      %v1574 = vadd.f32 %v1396, %v1398
      %1575 = vadd.xlane.f32.xlu0 %v1574
      %v1576 = vpop.xlane.xlu0 %1575
      %v1577 = vadd.f32 %v1400, %v1402
      %1578 = vadd.xlane.f32.xlu0 %v1577
      %v1579 = vpop.xlane.xlu0 %1578
      %v1580 = vadd.f32 %v1404, %v1406
      %1581 = vadd.xlane.f32.xlu0 %v1580
      %v1582 = vpop.xlane.xlu0 %1581
      %v1583 = vadd.f32 %v1408, %v1410
      %1584 = vadd.xlane.f32.xlu0 %v1583
      %v1585 = vpop.xlane.xlu0 %1584
      %v1586 = vadd.f32 %v1412, %v1414
      %1587 = vadd.xlane.f32.xlu0 %v1586
      %v1588 = vpop.xlane.xlu0 %1587
      %v1589 = vadd.f32 %v1416, %v1418
      %1590 = vadd.xlane.f32.xlu0 %v1589
      %v1591 = vpop.xlane.xlu0 %1590
      %v1592 = vadd.f32 %v1420, %v1422
      %1593 = vadd.xlane.f32.xlu0 %v1592
      %v1594 = vpop.xlane.xlu0 %1593
      %v1595 = vadd.f32 %v1424, %v1426
      %1596 = vadd.xlane.f32.xlu0 %v1595
      %v1597 = vpop.xlane.xlu0 %1596
      %v1598 = vadd.f32 %v1428, %v1430
      %1599 = vadd.xlane.f32.xlu0 %v1598
      %v1600 = vpop.xlane.xlu0 %1599
      %v1601 = vadd.f32 %v1432, %v1434
      %1602 = vadd.xlane.f32.xlu0 %v1601
      %v1603 = vpop.xlane.xlu0 %1602
      %v1604 = vadd.f32 %v1436, %v1438
      %1605 = vadd.xlane.f32.xlu0 %v1604
      %v1606 = vpop.xlane.xlu0 %1605
      %v1607 = vadd.f32 %v1440, %v1442
      %1608 = vadd.xlane.f32.xlu0 %v1607
      %v1609 = vpop.xlane.xlu0 %1608
      %v1610 = vadd.f32 %v1444, %v1446
      %1611 = vadd.xlane.f32.xlu0 %v1610
      %v1612 = vpop.xlane.xlu0 %1611
      %v1613 = vadd.f32 %v1448, %v1450
      %1614 = vadd.xlane.f32.xlu0 %v1613
      %v1615 = vpop.xlane.xlu0 %1614
      %v1616 = vadd.f32 %v1452, %v1454
      %1617 = vadd.xlane.f32.xlu0 %v1616
      %v1618 = vpop.xlane.xlu0 %1617
      %v1619 = vadd.f32 %v1456, %v1458
      %1620 = vadd.xlane.f32.xlu0 %v1619
      %v1621 = vpop.xlane.xlu0 %1620
      %v1622 = vadd.f32 %v1460, %v1462
      %1623 = vadd.xlane.f32.xlu0 %v1622
      %v1624 = vpop.xlane.xlu0 %1623
      %v1625 = vadd.f32 %v1464, %v1466
      %1626 = vadd.xlane.f32.xlu0 %v1625
      %v1627 = vpop.xlane.xlu0 %1626
      %v1628 = vadd.f32 %v1468, %v1470
      %1629 = vadd.xlane.f32.xlu0 %v1628
      %v1630 = vpop.xlane.xlu0 %1629
      %v1631 = vadd.f32 %v1503, %v1537
      %v1632 = vadd.f32 %v1504, %v1540
      %v1633 = vadd.f32 %v1505, %v1543
      %v1634 = vadd.f32 %v1506, %v1546
      %v1635 = vadd.f32 %v1507, %v1549
      %v1636 = vadd.f32 %v1508, %v1552
      %v1637 = vadd.f32 %v1509, %v1555
      %v1638 = vadd.f32 %v1510, %v1558
      %v1639 = vadd.f32 %v1511, %v1561
      %v1640 = vadd.f32 %v1512, %v1564
      %v1641 = vadd.f32 %v1513, %v1567
      %v1642 = vadd.f32 %v1514, %v1570
      %v1643 = vadd.f32 %v1515, %v1573
      %v1644 = vadd.f32 %v1516, %v1576
      %v1645 = vadd.f32 %v1517, %v1579
      %v1646 = vadd.f32 %v1518, %v1582
      %v1647 = vadd.f32 %v1519, %v1585
      %v1648 = vadd.f32 %v1520, %v1588
      %v1649 = vadd.f32 %v1521, %v1591
      %v1650 = vadd.f32 %v1522, %v1594
      %v1651 = vadd.f32 %v1523, %v1597
      %v1652 = vadd.f32 %v1524, %v1600
      %v1653 = vadd.f32 %v1525, %v1603
      %v1654 = vadd.f32 %v1526, %v1606
      %v1655 = vadd.f32 %v1527, %v1609
      %v1656 = vadd.f32 %v1528, %v1612
      %v1657 = vadd.f32 %v1529, %v1615
      %v1658 = vadd.f32 %v1530, %v1618
      %v1659 = vadd.f32 %v1531, %v1621
      %v1660 = vadd.f32 %v1532, %v1624
      %v1661 = vadd.f32 %v1533, %v1627
      %v1662 = vadd.f32 %v1534, %v1630
      %vm1663 = vcmask 7168
      %1664 = vst.msk [vmem:[#allocation3] sm:$0xff] %vm1663, %v1631
      %1665 = vst.msk [vmem:[#allocation3 + $0x8] sm:$0xff] %vm1663, %v1632
      %1666 = vst.msk [vmem:[#allocation3 + $0x10] sm:$0xff] %vm1663, %v1633
      %1667 = vst.msk [vmem:[#allocation3 + $0x18] sm:$0xff] %vm1663, %v1634
      %1668 = vst.msk [vmem:[#allocation3 + $0x20] sm:$0xff] %vm1663, %v1635
      %1669 = vst.msk [vmem:[#allocation3 + $0x28] sm:$0xff] %vm1663, %v1636
      %1670 = vst.msk [vmem:[#allocation3 + $0x30] sm:$0xff] %vm1663, %v1637
      %1671 = vst.msk [vmem:[#allocation3 + $0x38] sm:$0xff] %vm1663, %v1638
      %1672 = vst.msk [vmem:[#allocation3 + $0x40] sm:$0xff] %vm1663, %v1639
      %1673 = vst.msk [vmem:[#allocation3 + $0x48] sm:$0xff] %vm1663, %v1640
      %1674 = vst.msk [vmem:[#allocation3 + $0x50] sm:$0xff] %vm1663, %v1641
      %1675 = vst.msk [vmem:[#allocation3 + $0x58] sm:$0xff] %vm1663, %v1642
      %1676 = vst.msk [vmem:[#allocation3 + $0x60] sm:$0xff] %vm1663, %v1643
      %1677 = vst.msk [vmem:[#allocation3 + $0x68] sm:$0xff] %vm1663, %v1644
      %1678 = vst.msk [vmem:[#allocation3 + $0x70] sm:$0xff] %vm1663, %v1645
      %1679 = vst.msk [vmem:[#allocation3 + $0x78] sm:$0xff] %vm1663, %v1646
      %1680 = vst.msk [vmem:[#allocation3 + $0x80] sm:$0xff] %vm1663, %v1647
      %1681 = vst.msk [vmem:[#allocation3 + $0x88] sm:$0xff] %vm1663, %v1648
      %1682 = vst.msk [vmem:[#allocation3 + $0x90] sm:$0xff] %vm1663, %v1649
      %1683 = vst.msk [vmem:[#allocation3 + $0x98] sm:$0xff] %vm1663, %v1650
      %1684 = vst.msk [vmem:[#allocation3 + $0xa0] sm:$0xff] %vm1663, %v1651
      %1685 = vst.msk [vmem:[#allocation3 + $0xa8] sm:$0xff] %vm1663, %v1652
      %1686 = vst.msk [vmem:[#allocation3 + $0xb0] sm:$0xff] %vm1663, %v1653
      %1687 = vst.msk [vmem:[#allocation3 + $0xb8] sm:$0xff] %vm1663, %v1654
      %1688 = vst.msk [vmem:[#allocation3 + $0xc0] sm:$0xff] %vm1663, %v1655
      %1689 = vst.msk [vmem:[#allocation3 + $0xc8] sm:$0xff] %vm1663, %v1656
      %1690 = vst.msk [vmem:[#allocation3 + $0xd0] sm:$0xff] %vm1663, %v1657
      %1691 = vst.msk [vmem:[#allocation3 + $0xd8] sm:$0xff] %vm1663, %v1658
      %1692 = vst.msk [vmem:[#allocation3 + $0xe0] sm:$0xff] %vm1663, %v1659
      %1693 = vst.msk [vmem:[#allocation3 + $0xe8] sm:$0xff] %vm1663, %v1660
      %1694 = vst.msk [vmem:[#allocation3 + $0xf0] sm:$0xff] %vm1663, %v1661
      %1695 = vst.msk [vmem:[#allocation3 + $0xf8] sm:$0xff] %vm1663, %v1662
      %1696 = vst.msk [vmem:[#allocation2] sm:$0xff] %vm1663, %v991
      %1697 = vst.msk [vmem:[#allocation2 + $0x8] sm:$0xff] %vm1663, %v992
      %1698 = vst.msk [vmem:[#allocation2 + $0x10] sm:$0xff] %vm1663, %v993
      %1699 = vst.msk [vmem:[#allocation2 + $0x18] sm:$0xff] %vm1663, %v994
      %1700 = vst.msk [vmem:[#allocation2 + $0x20] sm:$0xff] %vm1663, %v995
      %1701 = vst.msk [vmem:[#allocation2 + $0x28] sm:$0xff] %vm1663, %v996
      %1702 = vst.msk [vmem:[#allocation2 + $0x30] sm:$0xff] %vm1663, %v997
      %1703 = vst.msk [vmem:[#allocation2 + $0x38] sm:$0xff] %vm1663, %v998
      %1704 = vst.msk [vmem:[#allocation2 + $0x40] sm:$0xff] %vm1663, %v999
      %1705 = vst.msk [vmem:[#allocation2 + $0x48] sm:$0xff] %vm1663, %v1000
      %1706 = vst.msk [vmem:[#allocation2 + $0x50] sm:$0xff] %vm1663, %v1001
      %1707 = vst.msk [vmem:[#allocation2 + $0x58] sm:$0xff] %vm1663, %v1002
      %1708 = vst.msk [vmem:[#allocation2 + $0x60] sm:$0xff] %vm1663, %v1003
      %1709 = vst.msk [vmem:[#allocation2 + $0x68] sm:$0xff] %vm1663, %v1004
      %1710 = vst.msk [vmem:[#allocation2 + $0x70] sm:$0xff] %vm1663, %v1005
      %1711 = vst.msk [vmem:[#allocation2 + $0x78] sm:$0xff] %vm1663, %v1006
      %1712 = vst.msk [vmem:[#allocation2 + $0x80] sm:$0xff] %vm1663, %v1007
      %1713 = vst.msk [vmem:[#allocation2 + $0x88] sm:$0xff] %vm1663, %v1008
      %1714 = vst.msk [vmem:[#allocation2 + $0x90] sm:$0xff] %vm1663, %v1009
      %1715 = vst.msk [vmem:[#allocation2 + $0x98] sm:$0xff] %vm1663, %v1010
      %1716 = vst.msk [vmem:[#allocation2 + $0xa0] sm:$0xff] %vm1663, %v1011
      %1717 = vst.msk [vmem:[#allocation2 + $0xa8] sm:$0xff] %vm1663, %v1012
      %1718 = vst.msk [vmem:[#allocation2 + $0xb0] sm:$0xff] %vm1663, %v1013
      %1719 = vst.msk [vmem:[#allocation2 + $0xb8] sm:$0xff] %vm1663, %v1014
      %1720 = vst.msk [vmem:[#allocation2 + $0xc0] sm:$0xff] %vm1663, %v1015
      %1721 = vst.msk [vmem:[#allocation2 + $0xc8] sm:$0xff] %vm1663, %v1016
      %1722 = vst.msk [vmem:[#allocation2 + $0xd0] sm:$0xff] %vm1663, %v1017
      %1723 = vst.msk [vmem:[#allocation2 + $0xd8] sm:$0xff] %vm1663, %v1018
      %1724 = vst.msk [vmem:[#allocation2 + $0xe0] sm:$0xff] %vm1663, %v1019
      %1725 = vst.msk [vmem:[#allocation2 + $0xe8] sm:$0xff] %vm1663, %v1020
      %1726 = vst.msk [vmem:[#allocation2 + $0xf0] sm:$0xff] %vm1663, %v1021
      %1727 = vst.msk [vmem:[#allocation2 + $0xf8] sm:$0xff] %vm1663, %v1022
      %v1728 = vld [vmem:[#allocation4] sm:$0xff]
      %v1729 = vld [vmem:[#allocation4 + $0x8] sm:$0xff]
      %v1730 = vld [vmem:[#allocation4 + $0x10] sm:$0xff]
      %v1731 = vld [vmem:[#allocation4 + $0x18] sm:$0xff]
      %v1732 = vld [vmem:[#allocation4 + $0x20] sm:$0xff]
      %v1733 = vld [vmem:[#allocation4 + $0x28] sm:$0xff]
      %v1734 = vld [vmem:[#allocation4 + $0x30] sm:$0xff]
      %v1735 = vld [vmem:[#allocation4 + $0x38] sm:$0xff]
      %v1736 = vld [vmem:[#allocation4 + $0x40] sm:$0xff]
      %v1737 = vld [vmem:[#allocation4 + $0x48] sm:$0xff]
      %v1738 = vld [vmem:[#allocation4 + $0x50] sm:$0xff]
      %v1739 = vld [vmem:[#allocation4 + $0x58] sm:$0xff]
      %v1740 = vld [vmem:[#allocation4 + $0x60] sm:$0xff]
      %v1741 = vld [vmem:[#allocation4 + $0x68] sm:$0xff]
      %v1742 = vld [vmem:[#allocation4 + $0x70] sm:$0xff]
      %v1743 = vld [vmem:[#allocation4 + $0x78] sm:$0xff]
      %v1744 = vld [vmem:[#allocation4 + $0x80] sm:$0xff]
      %v1745 = vld [vmem:[#allocation4 + $0x88] sm:$0xff]
      %v1746 = vld [vmem:[#allocation4 + $0x90] sm:$0xff]
      %v1747 = vld [vmem:[#allocation4 + $0x98] sm:$0xff]
      %v1748 = vld [vmem:[#allocation4 + $0xa0] sm:$0xff]
      %v1749 = vld [vmem:[#allocation4 + $0xa8] sm:$0xff]
      %v1750 = vld [vmem:[#allocation4 + $0xb0] sm:$0xff]
      %v1751 = vld [vmem:[#allocation4 + $0xb8] sm:$0xff]
      %v1752 = vld [vmem:[#allocation4 + $0xc0] sm:$0xff]
      %v1753 = vld [vmem:[#allocation4 + $0xc8] sm:$0xff]
      %v1754 = vld [vmem:[#allocation4 + $0xd0] sm:$0xff]
      %v1755 = vld [vmem:[#allocation4 + $0xd8] sm:$0xff]
      %v1756 = vld [vmem:[#allocation4 + $0xe0] sm:$0xff]
      %v1757 = vld [vmem:[#allocation4 + $0xe8] sm:$0xff]
      %v1758 = vld [vmem:[#allocation4 + $0xf0] sm:$0xff]
      %v1759 = vld [vmem:[#allocation4 + $0xf8] sm:$0xff]
      %1761 = vset.pattern.permute.xlu0 0
      %1762 = vperm.xlu0 %1761, %v1056
      %v1763 = vpop.permute.xlu0 %1762
      %1766 = vset.pattern.permute.xlu0 0
      %1767 = vperm.xlu0 %1766, %v1058
      %v1768 = vpop.permute.xlu0 %1767
      %1771 = vset.pattern.permute.xlu0 0
      %1772 = vperm.xlu0 %1771, %v1060
      %v1773 = vpop.permute.xlu0 %1772
      %1776 = vset.pattern.permute.xlu0 0
      %1777 = vperm.xlu0 %1776, %v1062
      %v1778 = vpop.permute.xlu0 %1777
      %1781 = vset.pattern.permute.xlu0 0
      %1782 = vperm.xlu0 %1781, %v1064
      %v1783 = vpop.permute.xlu0 %1782
      %1786 = vset.pattern.permute.xlu0 0
      %1787 = vperm.xlu0 %1786, %v1066
      %v1788 = vpop.permute.xlu0 %1787
      %1791 = vset.pattern.permute.xlu0 0
      %1792 = vperm.xlu0 %1791, %v1068
      %v1793 = vpop.permute.xlu0 %1792
      %1796 = vset.pattern.permute.xlu0 0
      %1797 = vperm.xlu0 %1796, %v1070
      %v1798 = vpop.permute.xlu0 %1797
      %1801 = vset.pattern.permute.xlu0 0
      %1802 = vperm.xlu0 %1801, %v1072
      %v1803 = vpop.permute.xlu0 %1802
      %1806 = vset.pattern.permute.xlu0 0
      %1807 = vperm.xlu0 %1806, %v1074
      %v1808 = vpop.permute.xlu0 %1807
      %1811 = vset.pattern.permute.xlu0 0
      %1812 = vperm.xlu0 %1811, %v1076
      %v1813 = vpop.permute.xlu0 %1812
      %1816 = vset.pattern.permute.xlu0 0
      %1817 = vperm.xlu0 %1816, %v1078
      %v1818 = vpop.permute.xlu0 %1817
      %1821 = vset.pattern.permute.xlu0 0
      %1822 = vperm.xlu0 %1821, %v1080
      %v1823 = vpop.permute.xlu0 %1822
      %1826 = vset.pattern.permute.xlu0 0
      %1827 = vperm.xlu0 %1826, %v1082
      %v1828 = vpop.permute.xlu0 %1827
      %1831 = vset.pattern.permute.xlu0 0
      %1832 = vperm.xlu0 %1831, %v1084
      %v1833 = vpop.permute.xlu0 %1832
      %1836 = vset.pattern.permute.xlu0 0
      %1837 = vperm.xlu0 %1836, %v1086
      %v1838 = vpop.permute.xlu0 %1837
      %1841 = vset.pattern.permute.xlu0 0
      %1842 = vperm.xlu0 %1841, %v1088
      %v1843 = vpop.permute.xlu0 %1842
      %1846 = vset.pattern.permute.xlu0 0
      %1847 = vperm.xlu0 %1846, %v1090
      %v1848 = vpop.permute.xlu0 %1847
      %1851 = vset.pattern.permute.xlu0 0
      %1852 = vperm.xlu0 %1851, %v1092
      %v1853 = vpop.permute.xlu0 %1852
      %1856 = vset.pattern.permute.xlu0 0
      %1857 = vperm.xlu0 %1856, %v1094
      %v1858 = vpop.permute.xlu0 %1857
      %1861 = vset.pattern.permute.xlu0 0
      %1862 = vperm.xlu0 %1861, %v1096
      %v1863 = vpop.permute.xlu0 %1862
      %1866 = vset.pattern.permute.xlu0 0
      %1867 = vperm.xlu0 %1866, %v1098
      %v1868 = vpop.permute.xlu0 %1867
      %1871 = vset.pattern.permute.xlu0 0
      %1872 = vperm.xlu0 %1871, %v1100
      %v1873 = vpop.permute.xlu0 %1872
      %1876 = vset.pattern.permute.xlu0 0
      %1877 = vperm.xlu0 %1876, %v1102
      %v1878 = vpop.permute.xlu0 %1877
      %1881 = vset.pattern.permute.xlu0 0
      %1882 = vperm.xlu0 %1881, %v1104
      %v1883 = vpop.permute.xlu0 %1882
      %1886 = vset.pattern.permute.xlu0 0
      %1887 = vperm.xlu0 %1886, %v1106
      %v1888 = vpop.permute.xlu0 %1887
      %1891 = vset.pattern.permute.xlu0 0
      %1892 = vperm.xlu0 %1891, %v1108
      %v1893 = vpop.permute.xlu0 %1892
      %1896 = vset.pattern.permute.xlu0 0
      %1897 = vperm.xlu0 %1896, %v1110
      %v1898 = vpop.permute.xlu0 %1897
      %1901 = vset.pattern.permute.xlu0 0
      %1902 = vperm.xlu0 %1901, %v1112
      %v1903 = vpop.permute.xlu0 %1902
      %1906 = vset.pattern.permute.xlu0 0
      %1907 = vperm.xlu0 %1906, %v1114
      %v1908 = vpop.permute.xlu0 %1907
      %1911 = vset.pattern.permute.xlu0 0
      %1912 = vperm.xlu0 %1911, %v1116
      %v1913 = vpop.permute.xlu0 %1912
      %1916 = vset.pattern.permute.xlu0 0
      %1917 = vperm.xlu0 %1916, %v1118
      %v1918 = vpop.permute.xlu0 %1917
      %v1920 = vmul.f32 %v1763, %v1728
      %v1921 = vmul.f32 %v1768, %v1729
      %v1922 = vmul.f32 %v1773, %v1730
      %v1923 = vmul.f32 %v1778, %v1731
      %v1924 = vmul.f32 %v1783, %v1732
      %v1925 = vmul.f32 %v1788, %v1733
      %v1926 = vmul.f32 %v1793, %v1734
      %v1927 = vmul.f32 %v1798, %v1735
      %v1928 = vmul.f32 %v1803, %v1736
      %v1929 = vmul.f32 %v1808, %v1737
      %v1930 = vmul.f32 %v1813, %v1738
      %v1931 = vmul.f32 %v1818, %v1739
      %v1932 = vmul.f32 %v1823, %v1740
      %v1933 = vmul.f32 %v1828, %v1741
      %v1934 = vmul.f32 %v1833, %v1742
      %v1935 = vmul.f32 %v1838, %v1743
      %v1936 = vmul.f32 %v1843, %v1744
      %v1937 = vmul.f32 %v1848, %v1745
      %v1938 = vmul.f32 %v1853, %v1746
      %v1939 = vmul.f32 %v1858, %v1747
      %v1940 = vmul.f32 %v1863, %v1748
      %v1941 = vmul.f32 %v1868, %v1749
      %v1942 = vmul.f32 %v1873, %v1750
      %v1943 = vmul.f32 %v1878, %v1751
      %v1944 = vmul.f32 %v1883, %v1752
      %v1945 = vmul.f32 %v1888, %v1753
      %v1946 = vmul.f32 %v1893, %v1754
      %v1947 = vmul.f32 %v1898, %v1755
      %v1948 = vmul.f32 %v1903, %v1756
      %v1949 = vmul.f32 %v1908, %v1757
      %v1950 = vmul.f32 %v1913, %v1758
      %v1951 = vmul.f32 %v1918, %v1759
      %v1952 = vpack.c.bf16 %v1348, %v1344
      %v1953 = vpack.c.bf16 %v1350, %v1346
      %v1954 = vpack.c.bf16 %v1356, %v1352
      %v1955 = vpack.c.bf16 %v1358, %v1354
      %v1956 = vpack.c.bf16 %v1364, %v1360
      %v1957 = vpack.c.bf16 %v1366, %v1362
      %v1958 = vpack.c.bf16 %v1372, %v1368
      %v1959 = vpack.c.bf16 %v1374, %v1370
      %v1960 = vpack.c.bf16 %v1380, %v1376
      %v1961 = vpack.c.bf16 %v1382, %v1378
      %v1962 = vpack.c.bf16 %v1388, %v1384
      %v1963 = vpack.c.bf16 %v1390, %v1386
      %v1964 = vpack.c.bf16 %v1396, %v1392
      %v1965 = vpack.c.bf16 %v1398, %v1394
      %v1966 = vpack.c.bf16 %v1404, %v1400
      %v1967 = vpack.c.bf16 %v1406, %v1402
      %v1968 = vpack.c.bf16 %v1412, %v1408
      %v1969 = vpack.c.bf16 %v1414, %v1410
      %v1970 = vpack.c.bf16 %v1420, %v1416
      %v1971 = vpack.c.bf16 %v1422, %v1418
      %v1972 = vpack.c.bf16 %v1428, %v1424
      %v1973 = vpack.c.bf16 %v1430, %v1426
      %v1974 = vpack.c.bf16 %v1436, %v1432
      %v1975 = vpack.c.bf16 %v1438, %v1434
      %v1976 = vpack.c.bf16 %v1444, %v1440
      %v1977 = vpack.c.bf16 %v1446, %v1442
      %v1978 = vpack.c.bf16 %v1452, %v1448
      %v1979 = vpack.c.bf16 %v1454, %v1450
      %v1980 = vpack.c.bf16 %v1460, %v1456
      %v1981 = vpack.c.bf16 %v1462, %v1458
      %v1982 = vpack.c.bf16 %v1468, %v1464
      %v1983 = vpack.c.bf16 %v1470, %v1466
      %v1984 = vld [vmem:[%s386] sm:$0xf]
      %v1985 = vld [vmem:[%s386 + $0x4] sm:$0xf]
      %v1986 = vld [vmem:[%s386 + $0x8] sm:$0xf]
      %v1987 = vld [vmem:[%s386 + $0xc] sm:$0xf]
      %v1988 = vld [vmem:[%s386 + $0x10] sm:$0xf]
      %v1989 = vld [vmem:[%s386 + $0x14] sm:$0xf]
      %v1990 = vld [vmem:[%s386 + $0x18] sm:$0xf]
      %v1991 = vld [vmem:[%s386 + $0x1c] sm:$0xf]
      %v1992 = vld [vmem:[%s386 + $0x20] sm:$0xf]
      %v1993 = vld [vmem:[%s386 + $0x24] sm:$0xf]
      %v1994 = vld [vmem:[%s386 + $0x28] sm:$0xf]
      %v1995 = vld [vmem:[%s386 + $0x2c] sm:$0xf]
      %v1996 = vld [vmem:[%s386 + $0x30] sm:$0xf]
      %v1997 = vld [vmem:[%s386 + $0x34] sm:$0xf]
      %v1998 = vld [vmem:[%s386 + $0x38] sm:$0xf]
      %v1999 = vld [vmem:[%s386 + $0x3c] sm:$0xf]
      %v2000 = vld [vmem:[%s386 + $0x40] sm:$0xf]
      %v2001 = vld [vmem:[%s386 + $0x44] sm:$0xf]
      %v2002 = vld [vmem:[%s386 + $0x48] sm:$0xf]
      %v2003 = vld [vmem:[%s386 + $0x4c] sm:$0xf]
      %v2004 = vld [vmem:[%s386 + $0x50] sm:$0xf]
      %v2005 = vld [vmem:[%s386 + $0x54] sm:$0xf]
      %v2006 = vld [vmem:[%s386 + $0x58] sm:$0xf]
      %v2007 = vld [vmem:[%s386 + $0x5c] sm:$0xf]
      %v2008 = vld [vmem:[%s386 + $0x60] sm:$0xf]
      %v2009 = vld [vmem:[%s386 + $0x64] sm:$0xf]
      %v2010 = vld [vmem:[%s386 + $0x68] sm:$0xf]
      %v2011 = vld [vmem:[%s386 + $0x6c] sm:$0xf]
      %v2012 = vld [vmem:[%s386 + $0x70] sm:$0xf]
      %v2013 = vld [vmem:[%s386 + $0x74] sm:$0xf]
      %v2014 = vld [vmem:[%s386 + $0x78] sm:$0xf]
      %v2015 = vld [vmem:[%s386 + $0x7c] sm:$0xf]
      %v2048 = vunpack.c.l.b16 %v1984
      %v2049 = vunpack.c.l.b16 %v1985
      %v2050 = vunpack.c.l.b16 %v1986
      %v2051 = vunpack.c.l.b16 %v1987
      %v2052 = vunpack.c.l.b16 %v1988
      %v2053 = vunpack.c.l.b16 %v1989
      %v2054 = vunpack.c.l.b16 %v1990
      %v2055 = vunpack.c.l.b16 %v1991
      %v2056 = vunpack.c.l.b16 %v1992
      %v2057 = vunpack.c.l.b16 %v1993
      %v2058 = vunpack.c.l.b16 %v1994
      %v2059 = vunpack.c.l.b16 %v1995
      %v2060 = vunpack.c.l.b16 %v1996
      %v2061 = vunpack.c.l.b16 %v1997
      %v2062 = vunpack.c.l.b16 %v1998
      %v2063 = vunpack.c.l.b16 %v1999
      %v2064 = vunpack.c.l.b16 %v2000
      %v2065 = vunpack.c.l.b16 %v2001
      %v2066 = vunpack.c.l.b16 %v2002
      %v2067 = vunpack.c.l.b16 %v2003
      %v2068 = vunpack.c.l.b16 %v2004
      %v2069 = vunpack.c.l.b16 %v2005
      %v2070 = vunpack.c.l.b16 %v2006
      %v2071 = vunpack.c.l.b16 %v2007
      %v2072 = vunpack.c.l.b16 %v2008
      %v2073 = vunpack.c.l.b16 %v2009
      %v2074 = vunpack.c.l.b16 %v2010
      %v2075 = vunpack.c.l.b16 %v2011
      %v2076 = vunpack.c.l.b16 %v2012
      %v2077 = vunpack.c.l.b16 %v2013
      %v2078 = vunpack.c.l.b16 %v2014
      %v2079 = vunpack.c.l.b16 %v2015
      %v2080 = vpack.c.b16 %v2049, %v2048
      %v2081 = vpack.c.b16 %v2051, %v2050
      %v2082 = vpack.c.b16 %v2053, %v2052
      %v2083 = vpack.c.b16 %v2055, %v2054
      %v2084 = vpack.c.b16 %v2057, %v2056
      %v2085 = vpack.c.b16 %v2059, %v2058
      %v2086 = vpack.c.b16 %v2061, %v2060
      %v2087 = vpack.c.b16 %v2063, %v2062
      %v2088 = vpack.c.b16 %v2065, %v2064
      %v2089 = vpack.c.b16 %v2067, %v2066
      %v2090 = vpack.c.b16 %v2069, %v2068
      %v2091 = vpack.c.b16 %v2071, %v2070
      %v2092 = vpack.c.b16 %v2073, %v2072
      %v2093 = vpack.c.b16 %v2075, %v2074
      %v2094 = vpack.c.b16 %v2077, %v2076
      %v2095 = vpack.c.b16 %v2079, %v2078
      %2112 = vmatpush.bf16.msra.mxu0 %v2087
      %2113 = vmatpush.bf16.msra.mxu0 %v2086
      %2114 = vmatpush.bf16.msra.mxu0 %v2085
      %2115 = vmatpush.bf16.msra.mxu0 %v2084
      %2116 = vmatpush.bf16.msra.mxu0 %v2083
      %2117 = vmatpush.bf16.msra.mxu0 %v2082
      %2118 = vmatpush.bf16.msra.mxu0 %v2081
      %2119 = vmatpush.bf16.msra.mxu0 %v2080
      %2120 = vmatmul.bf16.gmra.mxu0 %v1952
      %v2121 = vpop.f32.mrf.mxu0
      %v2122 = vadd.f32 0.0, %v2121
      %v2123 = vpop.f32.mrf.mxu0
      %v2124 = vadd.f32 0.0, %v2123
      %2125 = vmatmul.bf16.gmra.mxu0 %v1954
      %v2126 = vpop.f32.mrf.mxu0
      %v2127 = vadd.f32 0.0, %v2126
      %v2128 = vpop.f32.mrf.mxu0
      %v2129 = vadd.f32 0.0, %v2128
      %2130 = vmatmul.bf16.gmra.mxu0 %v1956
      %v2131 = vpop.f32.mrf.mxu0
      %v2132 = vadd.f32 0.0, %v2131
      %v2133 = vpop.f32.mrf.mxu0
      %v2134 = vadd.f32 0.0, %v2133
      %2135 = vmatmul.bf16.gmra.mxu0 %v1958
      %v2136 = vpop.f32.mrf.mxu0
      %v2137 = vadd.f32 0.0, %v2136
      %v2138 = vpop.f32.mrf.mxu0
      %v2139 = vadd.f32 0.0, %v2138
      %2140 = vmatmul.bf16.gmra.mxu0 %v1960
      %v2141 = vpop.f32.mrf.mxu0
      %v2142 = vadd.f32 0.0, %v2141
      %v2143 = vpop.f32.mrf.mxu0
      %v2144 = vadd.f32 0.0, %v2143
      %2145 = vmatmul.bf16.gmra.mxu0 %v1962
      %v2146 = vpop.f32.mrf.mxu0
      %v2147 = vadd.f32 0.0, %v2146
      %v2148 = vpop.f32.mrf.mxu0
      %v2149 = vadd.f32 0.0, %v2148
      %2150 = vmatmul.bf16.gmra.mxu0 %v1964
      %v2151 = vpop.f32.mrf.mxu0
      %v2152 = vadd.f32 0.0, %v2151
      %v2153 = vpop.f32.mrf.mxu0
      %v2154 = vadd.f32 0.0, %v2153
      %2155 = vmatmul.bf16.gmra.mxu0 %v1966
      %v2156 = vpop.f32.mrf.mxu0
      %v2157 = vadd.f32 0.0, %v2156
      %v2158 = vpop.f32.mrf.mxu0
      %v2159 = vadd.f32 0.0, %v2158
      %2160 = vmatmul.bf16.gmra.mxu0 %v1968
      %v2161 = vpop.f32.mrf.mxu0
      %v2162 = vadd.f32 0.0, %v2161
      %v2163 = vpop.f32.mrf.mxu0
      %v2164 = vadd.f32 0.0, %v2163
      %2165 = vmatmul.bf16.gmra.mxu0 %v1970
      %v2166 = vpop.f32.mrf.mxu0
      %v2167 = vadd.f32 0.0, %v2166
      %v2168 = vpop.f32.mrf.mxu0
      %v2169 = vadd.f32 0.0, %v2168
      %2170 = vmatmul.bf16.gmra.mxu0 %v1972
      %v2171 = vpop.f32.mrf.mxu0
      %v2172 = vadd.f32 0.0, %v2171
      %v2173 = vpop.f32.mrf.mxu0
      %v2174 = vadd.f32 0.0, %v2173
      %2175 = vmatmul.bf16.gmra.mxu0 %v1974
      %v2176 = vpop.f32.mrf.mxu0
      %v2177 = vadd.f32 0.0, %v2176
      %v2178 = vpop.f32.mrf.mxu0
      %v2179 = vadd.f32 0.0, %v2178
      %2180 = vmatmul.bf16.gmra.mxu0 %v1976
      %v2181 = vpop.f32.mrf.mxu0
      %v2182 = vadd.f32 0.0, %v2181
      %v2183 = vpop.f32.mrf.mxu0
      %v2184 = vadd.f32 0.0, %v2183
      %2185 = vmatmul.bf16.gmra.mxu0 %v1978
      %v2186 = vpop.f32.mrf.mxu0
      %v2187 = vadd.f32 0.0, %v2186
      %v2188 = vpop.f32.mrf.mxu0
      %v2189 = vadd.f32 0.0, %v2188
      %2190 = vmatmul.bf16.gmra.mxu0 %v1980
      %v2191 = vpop.f32.mrf.mxu0
      %v2192 = vadd.f32 0.0, %v2191
      %v2193 = vpop.f32.mrf.mxu0
      %v2194 = vadd.f32 0.0, %v2193
      %2195 = vmatmul.bf16.gmra.mxu0 %v1982
      %v2196 = vpop.f32.mrf.mxu0
      %v2197 = vadd.f32 0.0, %v2196
      %v2198 = vpop.f32.mrf.mxu0
      %v2199 = vadd.f32 0.0, %v2198
      %2200 = vdwg.mxu0
      %2201 = vmatpush.bf16.msra.mxu0 %v2095
      %2202 = vmatpush.bf16.msra.mxu0 %v2094
      %2203 = vmatpush.bf16.msra.mxu0 %v2093
      %2204 = vmatpush.bf16.msra.mxu0 %v2092
      %2205 = vmatpush.bf16.msra.mxu0 %v2091
      %2206 = vmatpush.bf16.msra.mxu0 %v2090
      %2207 = vmatpush.bf16.msra.mxu0 %v2089
      %2208 = vmatpush.bf16.msra.mxu0 %v2088
      %2209 = vmatmul.bf16.gmra.mxu0 %v1953
      %v2210 = vpop.f32.mrf.mxu0
      %v2211 = vadd.f32 %v2122, %v2210
      %v2212 = vpop.f32.mrf.mxu0
      %v2213 = vadd.f32 %v2124, %v2212
      %2214 = vmatmul.bf16.gmra.mxu0 %v1955
      %v2215 = vpop.f32.mrf.mxu0
      %v2216 = vadd.f32 %v2127, %v2215
      %v2217 = vpop.f32.mrf.mxu0
      %v2218 = vadd.f32 %v2129, %v2217
      %2219 = vmatmul.bf16.gmra.mxu0 %v1957
      %v2220 = vpop.f32.mrf.mxu0
      %v2221 = vadd.f32 %v2132, %v2220
      %v2222 = vpop.f32.mrf.mxu0
      %v2223 = vadd.f32 %v2134, %v2222
      %2224 = vmatmul.bf16.gmra.mxu0 %v1959
      %v2225 = vpop.f32.mrf.mxu0
      %v2226 = vadd.f32 %v2137, %v2225
      %v2227 = vpop.f32.mrf.mxu0
      %v2228 = vadd.f32 %v2139, %v2227
      %2229 = vmatmul.bf16.gmra.mxu0 %v1961
      %v2230 = vpop.f32.mrf.mxu0
      %v2231 = vadd.f32 %v2142, %v2230
      %v2232 = vpop.f32.mrf.mxu0
      %v2233 = vadd.f32 %v2144, %v2232
      %2234 = vmatmul.bf16.gmra.mxu0 %v1963
      %v2235 = vpop.f32.mrf.mxu0
      %v2236 = vadd.f32 %v2147, %v2235
      %v2237 = vpop.f32.mrf.mxu0
      %v2238 = vadd.f32 %v2149, %v2237
      %2239 = vmatmul.bf16.gmra.mxu0 %v1965
      %v2240 = vpop.f32.mrf.mxu0
      %v2241 = vadd.f32 %v2152, %v2240
      %v2242 = vpop.f32.mrf.mxu0
      %v2243 = vadd.f32 %v2154, %v2242
      %2244 = vmatmul.bf16.gmra.mxu0 %v1967
      %v2245 = vpop.f32.mrf.mxu0
      %v2246 = vadd.f32 %v2157, %v2245
      %v2247 = vpop.f32.mrf.mxu0
      %v2248 = vadd.f32 %v2159, %v2247
      %2249 = vmatmul.bf16.gmra.mxu0 %v1969
      %v2250 = vpop.f32.mrf.mxu0
      %v2251 = vadd.f32 %v2162, %v2250
      %v2252 = vpop.f32.mrf.mxu0
      %v2253 = vadd.f32 %v2164, %v2252
      %2254 = vmatmul.bf16.gmra.mxu0 %v1971
      %v2255 = vpop.f32.mrf.mxu0
      %v2256 = vadd.f32 %v2167, %v2255
      %v2257 = vpop.f32.mrf.mxu0
      %v2258 = vadd.f32 %v2169, %v2257
      %2259 = vmatmul.bf16.gmra.mxu0 %v1973
      %v2260 = vpop.f32.mrf.mxu0
      %v2261 = vadd.f32 %v2172, %v2260
      %v2262 = vpop.f32.mrf.mxu0
      %v2263 = vadd.f32 %v2174, %v2262
      %2264 = vmatmul.bf16.gmra.mxu0 %v1975
      %v2265 = vpop.f32.mrf.mxu0
      %v2266 = vadd.f32 %v2177, %v2265
      %v2267 = vpop.f32.mrf.mxu0
      %v2268 = vadd.f32 %v2179, %v2267
      %2269 = vmatmul.bf16.gmra.mxu0 %v1977
      %v2270 = vpop.f32.mrf.mxu0
      %v2271 = vadd.f32 %v2182, %v2270
      %v2272 = vpop.f32.mrf.mxu0
      %v2273 = vadd.f32 %v2184, %v2272
      %2274 = vmatmul.bf16.gmra.mxu0 %v1979
      %v2275 = vpop.f32.mrf.mxu0
      %v2276 = vadd.f32 %v2187, %v2275
      %v2277 = vpop.f32.mrf.mxu0
      %v2278 = vadd.f32 %v2189, %v2277
      %2279 = vmatmul.bf16.gmra.mxu0 %v1981
      %v2280 = vpop.f32.mrf.mxu0
      %v2281 = vadd.f32 %v2192, %v2280
      %v2282 = vpop.f32.mrf.mxu0
      %v2283 = vadd.f32 %v2194, %v2282
      %2284 = vmatmul.bf16.gmra.mxu0 %v1983
      %v2285 = vpop.f32.mrf.mxu0
      %v2286 = vadd.f32 %v2197, %v2285
      %v2287 = vpop.f32.mrf.mxu0
      %v2288 = vadd.f32 %v2199, %v2287
      %2289 = vdwg.mxu0
      %v2290 = vadd.f32 %v1920, %v2211
      %v2291 = vadd.f32 %v1921, %v2213
      %v2292 = vadd.f32 %v1922, %v2216
      %v2293 = vadd.f32 %v1923, %v2218
      %v2294 = vadd.f32 %v1924, %v2221
      %v2295 = vadd.f32 %v1925, %v2223
      %v2296 = vadd.f32 %v1926, %v2226
      %v2297 = vadd.f32 %v1927, %v2228
      %v2298 = vadd.f32 %v1928, %v2231
      %v2299 = vadd.f32 %v1929, %v2233
      %v2300 = vadd.f32 %v1930, %v2236
      %v2301 = vadd.f32 %v1931, %v2238
      %v2302 = vadd.f32 %v1932, %v2241
      %v2303 = vadd.f32 %v1933, %v2243
      %v2304 = vadd.f32 %v1934, %v2246
      %v2305 = vadd.f32 %v1935, %v2248
      %v2306 = vadd.f32 %v1936, %v2251
      %v2307 = vadd.f32 %v1937, %v2253
      %v2308 = vadd.f32 %v1938, %v2256
      %v2309 = vadd.f32 %v1939, %v2258
      %v2310 = vadd.f32 %v1940, %v2261
      %v2311 = vadd.f32 %v1941, %v2263
      %v2312 = vadd.f32 %v1942, %v2266
      %v2313 = vadd.f32 %v1943, %v2268
      %v2314 = vadd.f32 %v1944, %v2271
      %v2315 = vadd.f32 %v1945, %v2273
      %v2316 = vadd.f32 %v1946, %v2276
      %v2317 = vadd.f32 %v1947, %v2278
      %v2318 = vadd.f32 %v1948, %v2281
      %v2319 = vadd.f32 %v1949, %v2283
      %v2320 = vadd.f32 %v1950, %v2286
      %v2321 = vadd.f32 %v1951, %v2288
      %vm2322 = vcmask 523264
      %2323 = vst.msk [vmem:[#allocation4] sm:$0xff] %vm2322, %v2290
      %2324 = vst.msk [vmem:[#allocation4 + $0x8] sm:$0xff] %vm2322, %v2291
      %2325 = vst.msk [vmem:[#allocation4 + $0x10] sm:$0xff] %vm2322, %v2292
      %2326 = vst.msk [vmem:[#allocation4 + $0x18] sm:$0xff] %vm2322, %v2293
      %2327 = vst.msk [vmem:[#allocation4 + $0x20] sm:$0xff] %vm2322, %v2294
      %2328 = vst.msk [vmem:[#allocation4 + $0x28] sm:$0xff] %vm2322, %v2295
      %2329 = vst.msk [vmem:[#allocation4 + $0x30] sm:$0xff] %vm2322, %v2296
      %2330 = vst.msk [vmem:[#allocation4 + $0x38] sm:$0xff] %vm2322, %v2297
      %2331 = vst.msk [vmem:[#allocation4 + $0x40] sm:$0xff] %vm2322, %v2298
      %2332 = vst.msk [vmem:[#allocation4 + $0x48] sm:$0xff] %vm2322, %v2299
      %2333 = vst.msk [vmem:[#allocation4 + $0x50] sm:$0xff] %vm2322, %v2300
      %2334 = vst.msk [vmem:[#allocation4 + $0x58] sm:$0xff] %vm2322, %v2301
      %2335 = vst.msk [vmem:[#allocation4 + $0x60] sm:$0xff] %vm2322, %v2302
      %2336 = vst.msk [vmem:[#allocation4 + $0x68] sm:$0xff] %vm2322, %v2303
      %2337 = vst.msk [vmem:[#allocation4 + $0x70] sm:$0xff] %vm2322, %v2304
      %2338 = vst.msk [vmem:[#allocation4 + $0x78] sm:$0xff] %vm2322, %v2305
      %2339 = vst.msk [vmem:[#allocation4 + $0x80] sm:$0xff] %vm2322, %v2306
      %2340 = vst.msk [vmem:[#allocation4 + $0x88] sm:$0xff] %vm2322, %v2307
      %2341 = vst.msk [vmem:[#allocation4 + $0x90] sm:$0xff] %vm2322, %v2308
      %2342 = vst.msk [vmem:[#allocation4 + $0x98] sm:$0xff] %vm2322, %v2309
      %2343 = vst.msk [vmem:[#allocation4 + $0xa0] sm:$0xff] %vm2322, %v2310
      %2344 = vst.msk [vmem:[#allocation4 + $0xa8] sm:$0xff] %vm2322, %v2311
      %2345 = vst.msk [vmem:[#allocation4 + $0xb0] sm:$0xff] %vm2322, %v2312
      %2346 = vst.msk [vmem:[#allocation4 + $0xb8] sm:$0xff] %vm2322, %v2313
      %2347 = vst.msk [vmem:[#allocation4 + $0xc0] sm:$0xff] %vm2322, %v2314
      %2348 = vst.msk [vmem:[#allocation4 + $0xc8] sm:$0xff] %vm2322, %v2315
      %2349 = vst.msk [vmem:[#allocation4 + $0xd0] sm:$0xff] %vm2322, %v2316
      %2350 = vst.msk [vmem:[#allocation4 + $0xd8] sm:$0xff] %vm2322, %v2317
      %2351 = vst.msk [vmem:[#allocation4 + $0xe0] sm:$0xff] %vm2322, %v2318
      %2352 = vst.msk [vmem:[#allocation4 + $0xe8] sm:$0xff] %vm2322, %v2319
      %2353 = vst.msk [vmem:[#allocation4 + $0xf0] sm:$0xff] %vm2322, %v2320
      %2354 = vst.msk [vmem:[#allocation4 + $0xf8] sm:$0xff] %vm2322, %v2321
      // Predicated region
      $region49: #{tpu_custom_call.1} parent=43 // pred_check
        %p2355 = pneg %p409
      $region50: #{tpu_custom_call.1} parent=43 // pred_check_branch
        %2357 = sbr.rel (%p2355) target = $region52
      $region51: #{tpu_custom_call.1} parent=43 // pred_region
        %v2358 = vld [vmem:[#allocation3] sm:$0xff]
        %v2359 = vld [vmem:[#allocation3 + $0x8] sm:$0xff]
        %v2360 = vld [vmem:[#allocation3 + $0x10] sm:$0xff]
        %v2361 = vld [vmem:[#allocation3 + $0x18] sm:$0xff]
        %v2362 = vld [vmem:[#allocation3 + $0x20] sm:$0xff]
        %v2363 = vld [vmem:[#allocation3 + $0x28] sm:$0xff]
        %v2364 = vld [vmem:[#allocation3 + $0x30] sm:$0xff]
        %v2365 = vld [vmem:[#allocation3 + $0x38] sm:$0xff]
        %v2366 = vld [vmem:[#allocation3 + $0x40] sm:$0xff]
        %v2367 = vld [vmem:[#allocation3 + $0x48] sm:$0xff]
        %v2368 = vld [vmem:[#allocation3 + $0x50] sm:$0xff]
        %v2369 = vld [vmem:[#allocation3 + $0x58] sm:$0xff]
        %v2370 = vld [vmem:[#allocation3 + $0x60] sm:$0xff]
        %v2371 = vld [vmem:[#allocation3 + $0x68] sm:$0xff]
        %v2372 = vld [vmem:[#allocation3 + $0x70] sm:$0xff]
        %v2373 = vld [vmem:[#allocation3 + $0x78] sm:$0xff]
        %v2374 = vld [vmem:[#allocation3 + $0x80] sm:$0xff]
        %v2375 = vld [vmem:[#allocation3 + $0x88] sm:$0xff]
        %v2376 = vld [vmem:[#allocation3 + $0x90] sm:$0xff]
        %v2377 = vld [vmem:[#allocation3 + $0x98] sm:$0xff]
        %v2378 = vld [vmem:[#allocation3 + $0xa0] sm:$0xff]
        %v2379 = vld [vmem:[#allocation3 + $0xa8] sm:$0xff]
        %v2380 = vld [vmem:[#allocation3 + $0xb0] sm:$0xff]
        %v2381 = vld [vmem:[#allocation3 + $0xb8] sm:$0xff]
        %v2382 = vld [vmem:[#allocation3 + $0xc0] sm:$0xff]
        %v2383 = vld [vmem:[#allocation3 + $0xc8] sm:$0xff]
        %v2384 = vld [vmem:[#allocation3 + $0xd0] sm:$0xff]
        %v2385 = vld [vmem:[#allocation3 + $0xd8] sm:$0xff]
        %v2386 = vld [vmem:[#allocation3 + $0xe0] sm:$0xff]
        %v2387 = vld [vmem:[#allocation3 + $0xe8] sm:$0xff]
        %v2388 = vld [vmem:[#allocation3 + $0xf0] sm:$0xff]
        %v2389 = vld [vmem:[#allocation3 + $0xf8] sm:$0xff]
        %v2390 = vrcp.pop %v2358
        %v2391 = vrcp.pop %v2359
        %v2392 = vrcp.pop %v2360
        %v2393 = vrcp.pop %v2361
        %v2394 = vrcp.pop %v2362
        %v2395 = vrcp.pop %v2363
        %v2396 = vrcp.pop %v2364
        %v2397 = vrcp.pop %v2365
        %v2398 = vrcp.pop %v2366
        %v2399 = vrcp.pop %v2367
        %v2400 = vrcp.pop %v2368
        %v2401 = vrcp.pop %v2369
        %v2402 = vrcp.pop %v2370
        %v2403 = vrcp.pop %v2371
        %v2404 = vrcp.pop %v2372
        %v2405 = vrcp.pop %v2373
        %v2406 = vrcp.pop %v2374
        %v2407 = vrcp.pop %v2375
        %v2408 = vrcp.pop %v2376
        %v2409 = vrcp.pop %v2377
        %v2410 = vrcp.pop %v2378
        %v2411 = vrcp.pop %v2379
        %v2412 = vrcp.pop %v2380
        %v2413 = vrcp.pop %v2381
        %v2414 = vrcp.pop %v2382
        %v2415 = vrcp.pop %v2383
        %v2416 = vrcp.pop %v2384
        %v2417 = vrcp.pop %v2385
        %v2418 = vrcp.pop %v2386
        %v2419 = vrcp.pop %v2387
        %v2420 = vrcp.pop %v2388
        %v2421 = vrcp.pop %v2389
        %v2422 = vld [vmem:[#allocation4] sm:$0xff]
        %v2423 = vld [vmem:[#allocation4 + $0x8] sm:$0xff]
        %v2424 = vld [vmem:[#allocation4 + $0x10] sm:$0xff]
        %v2425 = vld [vmem:[#allocation4 + $0x18] sm:$0xff]
        %v2426 = vld [vmem:[#allocation4 + $0x20] sm:$0xff]
        %v2427 = vld [vmem:[#allocation4 + $0x28] sm:$0xff]
        %v2428 = vld [vmem:[#allocation4 + $0x30] sm:$0xff]
        %v2429 = vld [vmem:[#allocation4 + $0x38] sm:$0xff]
        %v2430 = vld [vmem:[#allocation4 + $0x40] sm:$0xff]
        %v2431 = vld [vmem:[#allocation4 + $0x48] sm:$0xff]
        %v2432 = vld [vmem:[#allocation4 + $0x50] sm:$0xff]
        %v2433 = vld [vmem:[#allocation4 + $0x58] sm:$0xff]
        %v2434 = vld [vmem:[#allocation4 + $0x60] sm:$0xff]
        %v2435 = vld [vmem:[#allocation4 + $0x68] sm:$0xff]
        %v2436 = vld [vmem:[#allocation4 + $0x70] sm:$0xff]
        %v2437 = vld [vmem:[#allocation4 + $0x78] sm:$0xff]
        %v2438 = vld [vmem:[#allocation4 + $0x80] sm:$0xff]
        %v2439 = vld [vmem:[#allocation4 + $0x88] sm:$0xff]
        %v2440 = vld [vmem:[#allocation4 + $0x90] sm:$0xff]
        %v2441 = vld [vmem:[#allocation4 + $0x98] sm:$0xff]
        %v2442 = vld [vmem:[#allocation4 + $0xa0] sm:$0xff]
        %v2443 = vld [vmem:[#allocation4 + $0xa8] sm:$0xff]
        %v2444 = vld [vmem:[#allocation4 + $0xb0] sm:$0xff]
        %v2445 = vld [vmem:[#allocation4 + $0xb8] sm:$0xff]
        %v2446 = vld [vmem:[#allocation4 + $0xc0] sm:$0xff]
        %v2447 = vld [vmem:[#allocation4 + $0xc8] sm:$0xff]
        %v2448 = vld [vmem:[#allocation4 + $0xd0] sm:$0xff]
        %v2449 = vld [vmem:[#allocation4 + $0xd8] sm:$0xff]
        %v2450 = vld [vmem:[#allocation4 + $0xe0] sm:$0xff]
        %v2451 = vld [vmem:[#allocation4 + $0xe8] sm:$0xff]
        %v2452 = vld [vmem:[#allocation4 + $0xf0] sm:$0xff]
        %v2453 = vld [vmem:[#allocation4 + $0xf8] sm:$0xff]
        %2455 = vset.pattern.permute.xlu0 0
        %2456 = vperm.xlu0 %2455, %v2390
        %v2457 = vpop.permute.xlu0 %2456
        %2460 = vset.pattern.permute.xlu0 0
        %2461 = vperm.xlu0 %2460, %v2391
        %v2462 = vpop.permute.xlu0 %2461
        %2465 = vset.pattern.permute.xlu0 0
        %2466 = vperm.xlu0 %2465, %v2392
        %v2467 = vpop.permute.xlu0 %2466
        %2470 = vset.pattern.permute.xlu0 0
        %2471 = vperm.xlu0 %2470, %v2393
        %v2472 = vpop.permute.xlu0 %2471
        %2475 = vset.pattern.permute.xlu0 0
        %2476 = vperm.xlu0 %2475, %v2394
        %v2477 = vpop.permute.xlu0 %2476
        %2480 = vset.pattern.permute.xlu0 0
        %2481 = vperm.xlu0 %2480, %v2395
        %v2482 = vpop.permute.xlu0 %2481
        %2485 = vset.pattern.permute.xlu0 0
        %2486 = vperm.xlu0 %2485, %v2396
        %v2487 = vpop.permute.xlu0 %2486
        %2490 = vset.pattern.permute.xlu0 0
        %2491 = vperm.xlu0 %2490, %v2397
        %v2492 = vpop.permute.xlu0 %2491
        %2495 = vset.pattern.permute.xlu0 0
        %2496 = vperm.xlu0 %2495, %v2398
        %v2497 = vpop.permute.xlu0 %2496
        %2500 = vset.pattern.permute.xlu0 0
        %2501 = vperm.xlu0 %2500, %v2399
        %v2502 = vpop.permute.xlu0 %2501
        %2505 = vset.pattern.permute.xlu0 0
        %2506 = vperm.xlu0 %2505, %v2400
        %v2507 = vpop.permute.xlu0 %2506
        %2510 = vset.pattern.permute.xlu0 0
        %2511 = vperm.xlu0 %2510, %v2401
        %v2512 = vpop.permute.xlu0 %2511
        %2515 = vset.pattern.permute.xlu0 0
        %2516 = vperm.xlu0 %2515, %v2402
        %v2517 = vpop.permute.xlu0 %2516
        %2520 = vset.pattern.permute.xlu0 0
        %2521 = vperm.xlu0 %2520, %v2403
        %v2522 = vpop.permute.xlu0 %2521
        %2525 = vset.pattern.permute.xlu0 0
        %2526 = vperm.xlu0 %2525, %v2404
        %v2527 = vpop.permute.xlu0 %2526
        %2530 = vset.pattern.permute.xlu0 0
        %2531 = vperm.xlu0 %2530, %v2405
        %v2532 = vpop.permute.xlu0 %2531
        %2535 = vset.pattern.permute.xlu0 0
        %2536 = vperm.xlu0 %2535, %v2406
        %v2537 = vpop.permute.xlu0 %2536
        %2540 = vset.pattern.permute.xlu0 0
        %2541 = vperm.xlu0 %2540, %v2407
        %v2542 = vpop.permute.xlu0 %2541
        %2545 = vset.pattern.permute.xlu0 0
        %2546 = vperm.xlu0 %2545, %v2408
        %v2547 = vpop.permute.xlu0 %2546
        %2550 = vset.pattern.permute.xlu0 0
        %2551 = vperm.xlu0 %2550, %v2409
        %v2552 = vpop.permute.xlu0 %2551
        %2555 = vset.pattern.permute.xlu0 0
        %2556 = vperm.xlu0 %2555, %v2410
        %v2557 = vpop.permute.xlu0 %2556
        %2560 = vset.pattern.permute.xlu0 0
        %2561 = vperm.xlu0 %2560, %v2411
        %v2562 = vpop.permute.xlu0 %2561
        %2565 = vset.pattern.permute.xlu0 0
        %2566 = vperm.xlu0 %2565, %v2412
        %v2567 = vpop.permute.xlu0 %2566
        %2570 = vset.pattern.permute.xlu0 0
        %2571 = vperm.xlu0 %2570, %v2413
        %v2572 = vpop.permute.xlu0 %2571
        %2575 = vset.pattern.permute.xlu0 0
        %2576 = vperm.xlu0 %2575, %v2414
        %v2577 = vpop.permute.xlu0 %2576
        %2580 = vset.pattern.permute.xlu0 0
        %2581 = vperm.xlu0 %2580, %v2415
        %v2582 = vpop.permute.xlu0 %2581
        %2585 = vset.pattern.permute.xlu0 0
        %2586 = vperm.xlu0 %2585, %v2416
        %v2587 = vpop.permute.xlu0 %2586
        %2590 = vset.pattern.permute.xlu0 0
        %2591 = vperm.xlu0 %2590, %v2417
        %v2592 = vpop.permute.xlu0 %2591
        %2595 = vset.pattern.permute.xlu0 0
        %2596 = vperm.xlu0 %2595, %v2418
        %v2597 = vpop.permute.xlu0 %2596
        %2600 = vset.pattern.permute.xlu0 0
        %2601 = vperm.xlu0 %2600, %v2419
        %v2602 = vpop.permute.xlu0 %2601
        %2605 = vset.pattern.permute.xlu0 0
        %2606 = vperm.xlu0 %2605, %v2420
        %v2607 = vpop.permute.xlu0 %2606
        %2610 = vset.pattern.permute.xlu0 0
        %2611 = vperm.xlu0 %2610, %v2421
        %v2612 = vpop.permute.xlu0 %2611
        %v2614 = vmul.f32 %v2422, %v2457
        %v2615 = vmul.f32 %v2423, %v2462
        %v2616 = vmul.f32 %v2424, %v2467
        %v2617 = vmul.f32 %v2425, %v2472
        %v2618 = vmul.f32 %v2426, %v2477
        %v2619 = vmul.f32 %v2427, %v2482
        %v2620 = vmul.f32 %v2428, %v2487
        %v2621 = vmul.f32 %v2429, %v2492
        %v2622 = vmul.f32 %v2430, %v2497
        %v2623 = vmul.f32 %v2431, %v2502
        %v2624 = vmul.f32 %v2432, %v2507
        %v2625 = vmul.f32 %v2433, %v2512
        %v2626 = vmul.f32 %v2434, %v2517
        %v2627 = vmul.f32 %v2435, %v2522
        %v2628 = vmul.f32 %v2436, %v2527
        %v2629 = vmul.f32 %v2437, %v2532
        %v2630 = vmul.f32 %v2438, %v2537
        %v2631 = vmul.f32 %v2439, %v2542
        %v2632 = vmul.f32 %v2440, %v2547
        %v2633 = vmul.f32 %v2441, %v2552
        %v2634 = vmul.f32 %v2442, %v2557
        %v2635 = vmul.f32 %v2443, %v2562
        %v2636 = vmul.f32 %v2444, %v2567
        %v2637 = vmul.f32 %v2445, %v2572
        %v2638 = vmul.f32 %v2446, %v2577
        %v2639 = vmul.f32 %v2447, %v2582
        %v2640 = vmul.f32 %v2448, %v2587
        %v2641 = vmul.f32 %v2449, %v2592
        %v2642 = vmul.f32 %v2450, %v2597
        %v2643 = vmul.f32 %v2451, %v2602
        %v2644 = vmul.f32 %v2452, %v2607
        %v2645 = vmul.f32 %v2453, %v2612
        %s2646 = sld [smem:[#allocation6]]
        %v2647 = vstv %s2646
        %v2648 = vmul.f32 %v2647, %v2614
        %v2649 = vmul.f32 %v2647, %v2615
        %v2650 = vmul.f32 %v2647, %v2616
        %v2651 = vmul.f32 %v2647, %v2617
        %v2652 = vmul.f32 %v2647, %v2618
        %v2653 = vmul.f32 %v2647, %v2619
        %v2654 = vmul.f32 %v2647, %v2620
        %v2655 = vmul.f32 %v2647, %v2621
        %v2656 = vmul.f32 %v2647, %v2622
        %v2657 = vmul.f32 %v2647, %v2623
        %v2658 = vmul.f32 %v2647, %v2624
        %v2659 = vmul.f32 %v2647, %v2625
        %v2660 = vmul.f32 %v2647, %v2626
        %v2661 = vmul.f32 %v2647, %v2627
        %v2662 = vmul.f32 %v2647, %v2628
        %v2663 = vmul.f32 %v2647, %v2629
        %v2664 = vmul.f32 %v2647, %v2630
        %v2665 = vmul.f32 %v2647, %v2631
        %v2666 = vmul.f32 %v2647, %v2632
        %v2667 = vmul.f32 %v2647, %v2633
        %v2668 = vmul.f32 %v2647, %v2634
        %v2669 = vmul.f32 %v2647, %v2635
        %v2670 = vmul.f32 %v2647, %v2636
        %v2671 = vmul.f32 %v2647, %v2637
        %v2672 = vmul.f32 %v2647, %v2638
        %v2673 = vmul.f32 %v2647, %v2639
        %v2674 = vmul.f32 %v2647, %v2640
        %v2675 = vmul.f32 %v2647, %v2641
        %v2676 = vmul.f32 %v2647, %v2642
        %v2677 = vmul.f32 %v2647, %v2643
        %v2678 = vmul.f32 %v2647, %v2644
        %v2679 = vmul.f32 %v2647, %v2645
        %v2680 = vld [vmem:[%s396] sm:$0xff]
        %v2681 = vld [vmem:[%s396 + $0x8] sm:$0xff]
        %v2682 = vld [vmem:[%s396 + $0x10] sm:$0xff]
        %v2683 = vld [vmem:[%s396 + $0x18] sm:$0xff]
        %v2684 = vld [vmem:[%s396 + $0x20] sm:$0xff]
        %v2685 = vld [vmem:[%s396 + $0x28] sm:$0xff]
        %v2686 = vld [vmem:[%s396 + $0x30] sm:$0xff]
        %v2687 = vld [vmem:[%s396 + $0x38] sm:$0xff]
        %v2688 = vld [vmem:[%s396 + $0x40] sm:$0xff]
        %v2689 = vld [vmem:[%s396 + $0x48] sm:$0xff]
        %v2690 = vld [vmem:[%s396 + $0x50] sm:$0xff]
        %v2691 = vld [vmem:[%s396 + $0x58] sm:$0xff]
        %v2692 = vld [vmem:[%s396 + $0x60] sm:$0xff]
        %v2693 = vld [vmem:[%s396 + $0x68] sm:$0xff]
        %v2694 = vld [vmem:[%s396 + $0x70] sm:$0xff]
        %v2695 = vld [vmem:[%s396 + $0x78] sm:$0xff]
        %v2696 = vld [vmem:[%s396 + $0x80] sm:$0xff]
        %v2697 = vld [vmem:[%s396 + $0x88] sm:$0xff]
        %v2698 = vld [vmem:[%s396 + $0x90] sm:$0xff]
        %v2699 = vld [vmem:[%s396 + $0x98] sm:$0xff]
        %v2700 = vld [vmem:[%s396 + $0xa0] sm:$0xff]
        %v2701 = vld [vmem:[%s396 + $0xa8] sm:$0xff]
        %v2702 = vld [vmem:[%s396 + $0xb0] sm:$0xff]
        %v2703 = vld [vmem:[%s396 + $0xb8] sm:$0xff]
        %v2704 = vld [vmem:[%s396 + $0xc0] sm:$0xff]
        %v2705 = vld [vmem:[%s396 + $0xc8] sm:$0xff]
        %v2706 = vld [vmem:[%s396 + $0xd0] sm:$0xff]
        %v2707 = vld [vmem:[%s396 + $0xd8] sm:$0xff]
        %v2708 = vld [vmem:[%s396 + $0xe0] sm:$0xff]
        %v2709 = vld [vmem:[%s396 + $0xe8] sm:$0xff]
        %v2710 = vld [vmem:[%s396 + $0xf0] sm:$0xff]
        %v2711 = vld [vmem:[%s396 + $0xf8] sm:$0xff]
        %v2712 = vadd.f32 %v2648, %v2680
        %v2713 = vadd.f32 %v2649, %v2681
        %v2714 = vadd.f32 %v2650, %v2682
        %v2715 = vadd.f32 %v2651, %v2683
        %v2716 = vadd.f32 %v2652, %v2684
        %v2717 = vadd.f32 %v2653, %v2685
        %v2718 = vadd.f32 %v2654, %v2686
        %v2719 = vadd.f32 %v2655, %v2687
        %v2720 = vadd.f32 %v2656, %v2688
        %v2721 = vadd.f32 %v2657, %v2689
        %v2722 = vadd.f32 %v2658, %v2690
        %v2723 = vadd.f32 %v2659, %v2691
        %v2724 = vadd.f32 %v2660, %v2692
        %v2725 = vadd.f32 %v2661, %v2693
        %v2726 = vadd.f32 %v2662, %v2694
        %v2727 = vadd.f32 %v2663, %v2695
        %v2728 = vadd.f32 %v2664, %v2696
        %v2729 = vadd.f32 %v2665, %v2697
        %v2730 = vadd.f32 %v2666, %v2698
        %v2731 = vadd.f32 %v2667, %v2699
        %v2732 = vadd.f32 %v2668, %v2700
        %v2733 = vadd.f32 %v2669, %v2701
        %v2734 = vadd.f32 %v2670, %v2702
        %v2735 = vadd.f32 %v2671, %v2703
        %v2736 = vadd.f32 %v2672, %v2704
        %v2737 = vadd.f32 %v2673, %v2705
        %v2738 = vadd.f32 %v2674, %v2706
        %v2739 = vadd.f32 %v2675, %v2707
        %v2740 = vadd.f32 %v2676, %v2708
        %v2741 = vadd.f32 %v2677, %v2709
        %v2742 = vadd.f32 %v2678, %v2710
        %v2743 = vadd.f32 %v2679, %v2711
        %2744 = vst.msk [vmem:[%s406] sm:$0xff] %vm2322, %v2712
        %2745 = vst.msk [vmem:[%s406 + $0x8] sm:$0xff] %vm2322, %v2713
        %2746 = vst.msk [vmem:[%s406 + $0x10] sm:$0xff] %vm2322, %v2714
        %2747 = vst.msk [vmem:[%s406 + $0x18] sm:$0xff] %vm2322, %v2715
        %2748 = vst.msk [vmem:[%s406 + $0x20] sm:$0xff] %vm2322, %v2716
        %2749 = vst.msk [vmem:[%s406 + $0x28] sm:$0xff] %vm2322, %v2717
        %2750 = vst.msk [vmem:[%s406 + $0x30] sm:$0xff] %vm2322, %v2718
        %2751 = vst.msk [vmem:[%s406 + $0x38] sm:$0xff] %vm2322, %v2719
        %2752 = vst.msk [vmem:[%s406 + $0x40] sm:$0xff] %vm2322, %v2720
        %2753 = vst.msk [vmem:[%s406 + $0x48] sm:$0xff] %vm2322, %v2721
        %2754 = vst.msk [vmem:[%s406 + $0x50] sm:$0xff] %vm2322, %v2722
        %2755 = vst.msk [vmem:[%s406 + $0x58] sm:$0xff] %vm2322, %v2723
        %2756 = vst.msk [vmem:[%s406 + $0x60] sm:$0xff] %vm2322, %v2724
        %2757 = vst.msk [vmem:[%s406 + $0x68] sm:$0xff] %vm2322, %v2725
        %2758 = vst.msk [vmem:[%s406 + $0x70] sm:$0xff] %vm2322, %v2726
        %2759 = vst.msk [vmem:[%s406 + $0x78] sm:$0xff] %vm2322, %v2727
        %2760 = vst.msk [vmem:[%s406 + $0x80] sm:$0xff] %vm2322, %v2728
        %2761 = vst.msk [vmem:[%s406 + $0x88] sm:$0xff] %vm2322, %v2729
        %2762 = vst.msk [vmem:[%s406 + $0x90] sm:$0xff] %vm2322, %v2730
        %2763 = vst.msk [vmem:[%s406 + $0x98] sm:$0xff] %vm2322, %v2731
        %2764 = vst.msk [vmem:[%s406 + $0xa0] sm:$0xff] %vm2322, %v2732
        %2765 = vst.msk [vmem:[%s406 + $0xa8] sm:$0xff] %vm2322, %v2733
        %2766 = vst.msk [vmem:[%s406 + $0xb0] sm:$0xff] %vm2322, %v2734
        %2767 = vst.msk [vmem:[%s406 + $0xb8] sm:$0xff] %vm2322, %v2735
        %2768 = vst.msk [vmem:[%s406 + $0xc0] sm:$0xff] %vm2322, %v2736
        %2769 = vst.msk [vmem:[%s406 + $0xc8] sm:$0xff] %vm2322, %v2737
        %2770 = vst.msk [vmem:[%s406 + $0xd0] sm:$0xff] %vm2322, %v2738
        %2771 = vst.msk [vmem:[%s406 + $0xd8] sm:$0xff] %vm2322, %v2739
        %2772 = vst.msk [vmem:[%s406 + $0xe0] sm:$0xff] %vm2322, %v2740
        %2773 = vst.msk [vmem:[%s406 + $0xe8] sm:$0xff] %vm2322, %v2741
        %2774 = vst.msk [vmem:[%s406 + $0xf0] sm:$0xff] %vm2322, %v2742
        %2775 = vst.msk [vmem:[%s406 + $0xf8] sm:$0xff] %vm2322, %v2743
      $region52: #{tpu_custom_call.1} parent=43 // pred_fallthru
        _
      %s2776 = smul.u32 32, %s25
      %p2777 = scmp.lt.s32.totalorder %s24, 1
      %s2778 = scalar_select %p2777, %s24, 1
      %p2779 = scmp.lt.s32.totalorder %s2776, 31
      %s2780 = scalar_select %p2779, %s2776, 31
      %s2781 = smul.addr %s2778, 32
      %s2782 = sadd.s32 %s2780, %s2781
      %s2783 = smul.addr %s2782, 8
      %s2784 = scalar_lea.vmem %s6, %s2783
      // Predicated region
      $region53: #{tpu_custom_call.1} parent=43 // pred_check
        %p2785 = pneg %p212
      $region54: #{tpu_custom_call.1} parent=43 // pred_check_branch
        %2787 = sbr.rel (%p2785) target = $region56
      $region55: #{tpu_custom_call.1} parent=43 // pred_region
        %s2788 = smul.u32 32, %s25
      $region56: #{tpu_custom_call.1} parent=43 // pred_fallthru
        _
    $region44: #{tpu_custom_call.1} parent=5 // pred_fallthru
      _
    %p2789 = scmp.le.s32.totalorder 2, %s14
    // Predicated region
    $region57: #{tpu_custom_call.1} parent=5 // pred_check
      %p2790 = pneg %p2789
    $region58: #{tpu_custom_call.1} parent=5 // pred_check_branch
      %2792 = sbr.rel (%p2790) target = $region60
    $region59: #{tpu_custom_call.1} parent=5 // pred_region
      %s2793 = ssub.s32 %s14, 2
      // Predicated region
      $region61: #{tpu_custom_call.1} parent=59 // pred_check
        %p2794 = pneg %p218
      $region62: #{tpu_custom_call.1} parent=59 // pred_check_branch
        %2796 = sbr.rel (%p2794) target = $region64
      $region63: #{tpu_custom_call.1} parent=59 // pred_region
        %s2797 = smul.u32 32, %s28
        %p2798 = scmp.lt.s32.totalorder %s27, 1
        %s2799 = scalar_select %p2798, %s27, 1
        %p2800 = scmp.lt.s32.totalorder %s2797, 31
        %s2801 = scalar_select %p2800, %s2797, 31
        %s2802 = smul.addr %s2799, 32
        %s2803 = sadd.s32 %s2801, %s2802
        %s2804 = smul.addr %s2803, 8
        %s2805 = scalar_lea.vmem %s6, %s2804
      $region64: #{tpu_custom_call.1} parent=59 // pred_fallthru
        _
    $region60: #{tpu_custom_call.1} parent=5 // pred_fallthru
      _
  $region6: #{tpu_custom_call.1} parent=0 // loop_footer
    %s18 = sadd.s32 1, %s14
  $region7: #{tpu_custom_call.1} parent=0 // loop_footer_branch
    %13 = sbr.rel target = $region3
  $region8: #{tpu_custom_call.1} parent=0 // loop_exit
    _

</llo_original>
